<compile_context>
chip_gen: v7x
topology: tpu7x:2x2x1
jax: 0.10.0
libtpu: 0.0.40
codegen_flags: <defaults>
</compile_context>

<pallas_src>
import functools
import math

import jax
import jax.numpy as jnp
from jax.experimental import pallas as pl
from jax.experimental.pallas import tpu as pltpu


# ----------------------------------------------------------------------------
# Fused NetworkI kernel
# ----------------------------------------------------------------------------
def _networki_kernel(x_ref, adj_bias_ref, act_ref,
                     ind_ref, ind_t_ref, bm_ref, tile_eye_ref,
                     emb_w_ref, emb_b_ref,
                     gat_w_ref, att_cat_ref, gat_b_ref,
                     bn_scale_ref, bn_shift_ref,
                     ff1_w_ref, ff1_b_ref, ff2_w_ref, ff2_b_ref,
                     dec0_wf_ref, dec0_wa_ref, dec0_b_ref,
                     dec1_w_ref, dec1_b_ref,
                     dec2_w_ref, dec2_b_ref,
                     out_ref,
                     *, num_layers, heads, neg_slope):
    """Whole NetworkI forward; all operands resident in VMEM / vregs."""
    f32 = jnp.float32
    num_nodes = adj_bias_ref.shape[0]          # N
    hn = adj_bias_ref.shape[1]                 # H * N (lane-dense head axis)

    adj_bias = adj_bias_ref[...]               # (N, H*N) additive mask (0 / -1e30)
    tile_eye = tile_eye_ref[...]               # (N, H*N) delta(j, j') per head group
    ind = ind_ref[...]                         # (H, H*N) head indicator
    ind_t = ind_t_ref[...]                     # (H*N, H)
    bm = bm_ref[...]                           # (H*N, E) block-diagonal 0/1 mask

    # ---- Encoder: embedding layer ------------------------------------------
    x = jnp.dot(x_ref[...], emb_w_ref[...],
                preferred_element_type=f32) + emb_b_ref[...]          # (N, E)

    # ---- Encoder: graph layers ----------------------------------------------
    for l in range(num_layers):
        # GATConv projection
        xp = jnp.dot(x, gat_w_ref[l], preferred_element_type=f32)     # (N, E)

        # Fused attention coefficients: one (N,E)@(E,2*H*N) matmul gives both
        #   src_pre[j, h*N+j'] = a_src[j, h]   (constant across j')
        #   dst_bc [i, h*N+j ] = a_dst[i, h]   (constant across j)
        proj = jnp.dot(xp, att_cat_ref[l], preferred_element_type=f32)  # (N, 2*H*N)
        src_pre = proj[:, :hn]
        dst_bc = proj[:, hn:]
        # recover the per-source row: src_row[0, h*N+j] = a_src[j, h]
        src_row = jnp.sum(src_pre * tile_eye, axis=0, keepdims=True)  # (1, H*N)

        # lane-dense logits for all heads: e[i, h*N+j] = a_dst[i,h] + a_src[j,h]
        e = dst_bc + src_row
        e = jnp.maximum(e, neg_slope * e)                             # LeakyReLU(0.2)
        e = e + adj_bias                                              # mask non-edges
        e = e - jnp.max(e, axis=-1, keepdims=True)                    # row-global max (exact per head)
        p = jnp.exp(e)                                                # masked lanes -> 0

        # per-head denominators + broadcast back, both via indicator matmuls
        denom = jnp.dot(p, ind_t, preferred_element_type=f32)         # (N, H)
        inv = pl.reciprocal(denom, approx=True)
        p = p * jnp.dot(inv, ind, preferred_element_type=f32)         # normalized alphas

        # per-head aggregation + concat as ONE block-diagonal matmul
        xp_bd = jnp.concatenate([xp] * heads, axis=0) * bm            # (H*N, E)
        y = jnp.dot(p, xp_bd, preferred_element_type=f32) + gat_b_ref[l]   # (N, E)

        # residual + folded BatchNorm (scale/shift)
        x = (x + y) * bn_scale_ref[2 * l] + bn_shift_ref[2 * l]

        # position-wise feed-forward + residual + folded BatchNorm
        t = jnp.dot(x, ff1_w_ref[l], preferred_element_type=f32) + ff1_b_ref[l]
        t = jnp.maximum(t, 0.0)                                       # ReLU
        t = jnp.dot(t, ff2_w_ref[l], preferred_element_type=f32) + ff2_b_ref[l]
        x = (x + t) * bn_scale_ref[2 * l + 1] + bn_shift_ref[2 * l + 1]

    # ---- decoderI -------------------------------------------------------------
    xm = jnp.sum(x, axis=0, keepdims=True) * (1.0 / num_nodes)        # (1, E) mean over nodes
    # concat([xm, action]) @ W0  ==  xm @ W0[:E] + action @ W0[E:]
    h0 = (jnp.dot(xm, dec0_wf_ref[...], preferred_element_type=f32)
          + jnp.dot(act_ref[...], dec0_wa_ref[...], preferred_element_type=f32)
          + dec0_b_ref[...])
    h0 = jnp.maximum(h0, 0.0)                                         # (1, 64)
    h1 = jnp.dot(h0, dec1_w_ref[...], preferred_element_type=f32) + dec1_b_ref[...]
    h1 = jnp.maximum(h1, 0.0)                                         # (1, 32)
    out_ref[...] = (jnp.sum(h1 * dec2_w_ref[...], axis=-1, keepdims=True)
                    + dec2_b_ref[...])                                # (1, 1)


# ----------------------------------------------------------------------------
# Wrapper
# ----------------------------------------------------------------------------
def _dense_adjacency(edge_index, num_nodes):
    """adj[i, j] = 1 iff edge j -> i (PyG: row0=src, row1=dst), plus self-loops.

    NOTE: duplicate edges are deduplicated -> simple graphs only."""
    src, dst = edge_index[0], edge_index[1]
    adj = jnp.zeros((num_nodes, num_nodes), jnp.float32).at[dst, src].set(1.0)
    return jnp.maximum(adj, jnp.eye(num_nodes, dtype=jnp.float32))


def networki_forward(x_nodes, action, edge_index, params):
    f32 = jnp.float32
    num_nodes, d_in = x_nodes.shape
    d_act = action.shape[0]
    num_layers, heads, head_dim = params["att_src"].shape
    emb_dim = heads * head_dim
    pad = 8
    big_neg = jnp.float32(-1e30)

    # additive adjacency bias, tiled to the (N, H*N) lane-dense layout
    adj = _dense_adjacency(edge_index, num_nodes)
    adj_bias = jnp.tile(jnp.where(adj > 0.0, jnp.float32(0.0), big_neg), (1, heads))

    # zero-pad the 3-wide node features / action so every contracting dim is >= 8
    x_pad = jnp.zeros((num_nodes, pad), f32).at[:, :d_in].set(x_nodes)
    act_pad = jnp.zeros((1, pad), f32).at[0, :d_act].set(action)
    emb_w_pad = jnp.zeros((pad, emb_dim), f32).at[:d_in, :].set(params["emb_w"])
    emb_b = params["emb_b"][None, :]

    # head-indicator helpers for the lane-dense attention layout
    ind = jnp.repeat(jnp.eye(heads, dtype=f32), num_nodes, axis=1)        # (H, H*N)
    ind_t = ind.T                                                          # (H*N, H)
    bm = jnp.kron(jnp.eye(heads, dtype=f32),
                  jnp.ones((num_nodes, head_dim), f32))                    # (H*N, E)
    tile_eye = jnp.tile(jnp.eye(num_nodes, dtype=f32), (1, heads))         # (N, H*N)

    # expand per-head attention vectors (L,H,C) -> "big" matrices (L,E,H*N) so
    # one (N,E)@(E,2*H*N) matmul yields both a_src and a_dst, pre-broadcast.
    eye_h = jnp.eye(heads, dtype=f32)

    def att_to_big(att):
        m = (att[:, :, :, None] * eye_h[None, :, None, :]).reshape(
            num_layers, emb_dim, heads)                                    # (L, E, H)
        return jnp.einsum("leh,hk->lek", m, ind)                           # (L, E, H*N)

    att_cat = jnp.concatenate([att_to_big(params["att_src"]),
                               att_to_big(params["att_dst"])], axis=-1)    # (L, E, 2*H*N)

    gat_b = params["gat_b"][:, None, :]                                    # (L, 1, E)

    # fold inference BatchNorm into per-layer scale/shift constants
    bn_scale = params["bn_gamma"] * jax.lax.rsqrt(params["bn_var"] + 1e-5)
    bn_shift = params["bn_beta"] - params["bn_mean"] * bn_scale
    bn_scale = bn_scale[:, None, :]                                        # (2L, 1, E)
    bn_shift = bn_shift[:, None, :]                                        # (2L, 1, E)

    ff1_b = params["ff1_b"][:, None, :]                                    # (L, 1, F)
    ff2_b = params["ff2_b"][:, None, :]                                    # (L, 1, E)

    dec0_wf = params["dec0_w"][:emb_dim]                                   # (E, 64)
    dec0_wa = jnp.zeros((pad, params["dec0_w"].shape[1]), f32).at[:d_act, :].set(
        params["dec0_w"][emb_dim:])                                        # (8, 64)
    dec0_b = params["dec0_b"][None, :]
    dec1_w = params["dec1_w"]
    dec1_b = params["dec1_b"][None, :]
    dec2_w = params["dec2_w"].T                                            # (1, 32)
    dec2_b = params["dec2_b"][None, :]                                     # (1, 1)

    kernel = functools.partial(_networki_kernel, num_layers=num_layers,
                               heads=heads, neg_slope=0.2)
    out = pl.pallas_call(
        kernel,
        out_shape=jax.ShapeDtypeStruct((1, 1), f32),
        compiler_params=pltpu.CompilerParams(vmem_limit_bytes=32 * 1024 * 1024),
    )(x_pad, adj_bias, act_pad,
      ind, ind_t, bm, tile_eye,
      emb_w_pad, emb_b,
      params["gat_w"], att_cat, gat_b,
      bn_scale, bn_shift,
      params["ff1_w"], ff1_b, params["ff2_w"], ff2_b,
      dec0_wf, dec0_wa, dec0_b, dec1_w, dec1_b, dec2_w, dec2_b)
    return out[0]                                                          # shape (1,)


# ----------------------------------------------------------------------------
# Parameters (deterministic, PyTorch-style ranges) and plain-JAX reference
# ----------------------------------------------------------------------------
def init_params(key, *, node_feature_size=3, embedding_layers_size=128, heads=8,
                graph_layers_num=3, ff_layers_size=512, linear_layers_size=(64, 32)):
    E, F, L = embedding_layers_size, ff_layers_size, graph_layers_num
    C = E // heads
    d0, d1 = linear_layers_size
    keys = iter(jax.random.split(key, 24))

    def u(shape, fan_in):
        s = 1.0 / math.sqrt(fan_in)
        return jax.random.uniform(next(keys), shape, jnp.float32, -s, s)

    return {
        "emb_w": u((node_feature_size, E), node_feature_size),
        "emb_b": u((E,), node_feature_size),
        "gat_w": u((L, E, E), E),                 # GATConv lin, (in, heads*out) layout
        "att_src": u((L, heads, C), C),
        "att_dst": u((L, heads, C), C),
        "gat_b": jnp.zeros((L, E), jnp.float32),
        "bn_gamma": jax.random.uniform(next(keys), (2 * L, E), jnp.float32, 0.5, 1.5),
        "bn_beta": jax.random.uniform(next(keys), (2 * L, E), jnp.float32, -0.5, 0.5),
        "bn_mean": jax.random.uniform(next(keys), (2 * L, E), jnp.float32, -0.5, 0.5),
        "bn_var": jax.random.uniform(next(keys), (2 * L, E), jnp.float32, 0.5, 1.5),
        "ff1_w": u((L, E, F), E),
        "ff1_b": u((L, F), E),
        "ff2_w": u((L, F, E), F),
        "ff2_b": u((L, E), F),
        "dec0_w": u((E + 3, d0), E + 3),
        "dec0_b": u((d0,), E + 3),
        "dec1_w": u((d0, d1), d0),                # NoisyLinear.weight_mu (eval path)
        "dec1_b": u((d1,), d0),
        "dec2_w": u((d1, 1), d1),
        "dec2_b": u((1,), d1),
    }


def _reference_forward(x_nodes, action, adj, params, neg_slope=0.2, bn_eps=1e-5):
    """Plain-JAX mirror of the PyTorch NetworkI eval-mode forward, for validation."""
    L, heads, C = params["att_src"].shape
    E = heads * C
    big_neg = -1e30

    def bn(v, i):
        inv = params["bn_gamma"][i] * jax.lax.rsqrt(params["bn_var"][i] + bn_eps)
        return (v - params["bn_mean"][i]) * inv + params["bn_beta"][i]

    x = x_nodes @ params["emb_w"] + params["emb_b"]
    for l in range(L):
        xp = x @ params["gat_w"][l]                                   # (N, E)
        xph = xp.reshape(-1, heads, C)                                # (N, H, C)
        a_src = (xph * params["att_src"][l][None]).sum(-1)            # (N, H)
        a_dst = (xph * params["att_dst"][l][None]).sum(-1)            # (N, H)
        e = a_dst[:, None, :] + a_src[None, :, :]                     # (N_dst, N_src, H)
        e = jnp.where(e > 0, e, neg_slope * e)
        e = jnp.where(adj[:, :, None] > 0, e, big_neg)
        p = jax.nn.softmax(e, axis=1)                                 # softmax over src
        y = jnp.einsum("ijh,jhc->ihc", p, xph).reshape(-1, E) + params["gat_b"][l]
        x = bn(x + y, 2 * l)
        t = jax.nn.relu(x @ params["ff1_w"][l] + params["ff1_b"][l])
        t = t @ params["ff2_w"][l] + params["ff2_b"][l]
        x = bn(x + t, 2 * l + 1)
    xm = x.mean(axis=0)
    h = jnp.concatenate([xm, action], axis=0)
    h = jax.nn.relu(h @ params["dec0_w"] + params["dec0_b"])
    h = jax.nn.relu(h @ params["dec1_w"] + params["dec1_b"])
    return h @ params["dec2_w"] + params["dec2_b"]


# ----------------------------------------------------------------------------
# Self-test
# ----------------------------------------------------------------------------
if __name__ == "__main__":
    NODE_F, EMB, HEADS, LAYERS, FF = 3, 128, 8, 2, 256
    N = 16

    key = jax.random.PRNGKey(0)
    kp, kx, ka, ke = jax.random.split(key, 4)
    params = init_params(kp, node_feature_size=NODE_F, embedding_layers_size=EMB,
                         heads=HEADS, graph_layers_num=LAYERS, ff_layers_size=FF,
                         linear_layers_size=(64, 32))
    x_nodes = jax.random.normal(kx, (N, NODE_F), dtype=jnp.float32)
    action = jax.random.normal(ka, (NODE_F,), dtype=jnp.float32)

    # small deterministic graph: bidirectional ring + a few random chords
    ring = jnp.arange(N, dtype=jnp.int32)
    nxt = (ring + 1) % N
    extra = jax.random.randint(ke, (2, 8), 0, N, dtype=jnp.int32)
    edge_index = jnp.concatenate(
        [jnp.stack([ring, nxt]), jnp.stack([nxt, ring]), extra], axis=1)   # (2, 40)

    out = jax.block_until_ready(networki_forward(x_nodes, action, edge_index, params))

    ref = _reference_forward(x_nodes, action, _dense_adjacency(edge_index, N), params)
    assert out.shape == (1,)
    assert bool(jnp.all(jnp.isfinite(out)))
    assert jnp.allclose(out, ref, atol=5e-2, rtol=5e-2), (out, ref)

    print("KERNEL_OK")
</pallas_src>

<mosaic_0001>
module attributes {stable_mosaic.version = 11 : i64} {
  func.func @_networki_kernel(%arg0: memref<16x8xf32, #tpu.memory_space<vmem>>, %arg1: memref<16x128xf32, #tpu.memory_space<vmem>>, %arg2: memref<1x8xf32, #tpu.memory_space<vmem>>, %arg3: memref<8x128xf32, #tpu.memory_space<vmem>>, %arg4: memref<128x8xf32, #tpu.memory_space<vmem>>, %arg5: memref<128x128xf32, #tpu.memory_space<vmem>>, %arg6: memref<16x128xf32, #tpu.memory_space<vmem>>, %arg7: memref<8x128xf32, #tpu.memory_space<vmem>>, %arg8: memref<1x128xf32, #tpu.memory_space<vmem>>, %arg9: memref<2x128x128xf32, #tpu.memory_space<vmem>>, %arg10: memref<2x128x256xf32, #tpu.memory_space<vmem>>, %arg11: memref<2x1x128xf32, #tpu.memory_space<vmem>>, %arg12: memref<4x1x128xf32, #tpu.memory_space<vmem>>, %arg13: memref<4x1x128xf32, #tpu.memory_space<vmem>>, %arg14: memref<2x128x256xf32, #tpu.memory_space<vmem>>, %arg15: memref<2x1x256xf32, #tpu.memory_space<vmem>>, %arg16: memref<2x256x128xf32, #tpu.memory_space<vmem>>, %arg17: memref<2x1x128xf32, #tpu.memory_space<vmem>>, %arg18: memref<128x64xf32, #tpu.memory_space<vmem>>, %arg19: memref<8x64xf32, #tpu.memory_space<vmem>>, %arg20: memref<1x64xf32, #tpu.memory_space<vmem>>, %arg21: memref<64x32xf32, #tpu.memory_space<vmem>>, %arg22: memref<1x32xf32, #tpu.memory_space<vmem>>, %arg23: memref<1x32xf32, #tpu.memory_space<vmem>>, %arg24: memref<1x1xf32, #tpu.memory_space<vmem>>, %arg25: memref<1x1xf32, #tpu.memory_space<vmem>>) attributes {dimension_semantics = [], scalar_prefetch = 0 : i64, scratch_operands = 0 : i64, tpu.core_type = #tpu.core_type<tc>} {
    %c0 = arith.constant 0 : index
    %c0_0 = arith.constant 0 : index
    %0 = vector.load %arg1[%c0, %c0_0] : memref<16x128xf32, #tpu.memory_space<vmem>>, vector<16x128xf32>
    %c0_1 = arith.constant 0 : index
    %c0_2 = arith.constant 0 : index
    %1 = vector.load %arg6[%c0_1, %c0_2] : memref<16x128xf32, #tpu.memory_space<vmem>>, vector<16x128xf32>
    %c0_3 = arith.constant 0 : index
    %c0_4 = arith.constant 0 : index
    %2 = vector.load %arg3[%c0_3, %c0_4] : memref<8x128xf32, #tpu.memory_space<vmem>>, vector<8x128xf32>
    %c0_5 = arith.constant 0 : index
    %c0_6 = arith.constant 0 : index
    %3 = vector.load %arg4[%c0_5, %c0_6] : memref<128x8xf32, #tpu.memory_space<vmem>>, vector<128x8xf32>
    %c0_7 = arith.constant 0 : index
    %c0_8 = arith.constant 0 : index
    %4 = vector.load %arg5[%c0_7, %c0_8] : memref<128x128xf32, #tpu.memory_space<vmem>>, vector<128x128xf32>
    %c0_9 = arith.constant 0 : index
    %c0_10 = arith.constant 0 : index
    %5 = vector.load %arg0[%c0_9, %c0_10] : memref<16x8xf32, #tpu.memory_space<vmem>>, vector<16x8xf32>
    %c0_11 = arith.constant 0 : index
    %c0_12 = arith.constant 0 : index
    %6 = vector.load %arg7[%c0_11, %c0_12] : memref<8x128xf32, #tpu.memory_space<vmem>>, vector<8x128xf32>
    %cst = arith.constant dense<0.000000e+00> : vector<16x128xf32>
    %7 = tpu.matmul %5, %6, %cst {dimension_numbers = #tpu.dot_dimension_numbers<[1], [0], [0], [1], [0, 0, 1, 1], [], []>} : vector<16x8xf32>, vector<8x128xf32>, vector<16x128xf32> -> vector<16x128xf32>
    %c0_13 = arith.constant 0 : index
    %c0_14 = arith.constant 0 : index
    %8 = vector.load %arg8[%c0_13, %c0_14] : memref<1x128xf32, #tpu.memory_space<vmem>>, vector<1x128xf32>
    %9 = vector.broadcast %8 : vector<1x128xf32> to vector<16x128xf32>
    %10 = arith.addf %7, %9 : vector<16x128xf32>
    %c0_15 = arith.constant 0 : index
    %c0_16 = arith.constant 0 : index
    %c0_17 = arith.constant 0 : index
    %11 = vector.load %arg9[%c0_15, %c0_16, %c0_17] : memref<2x128x128xf32, #tpu.memory_space<vmem>>, vector<1x128x128xf32>
    %12 = vector.shape_cast %11 : vector<1x128x128xf32> to vector<128x128xf32>
    %cst_18 = arith.constant dense<0.000000e+00> : vector<16x128xf32>
    %13 = tpu.matmul %10, %12, %cst_18 {dimension_numbers = #tpu.dot_dimension_numbers<[1], [0], [0], [1], [0, 0, 1, 1], [], []>} : vector<16x128xf32>, vector<128x128xf32>, vector<16x128xf32> -> vector<16x128xf32>
    %c0_19 = arith.constant 0 : index
    %c0_20 = arith.constant 0 : index
    %c0_21 = arith.constant 0 : index
    %14 = vector.load %arg10[%c0_19, %c0_20, %c0_21] : memref<2x128x256xf32, #tpu.memory_space<vmem>>, vector<1x128x256xf32>
    %15 = vector.shape_cast %14 : vector<1x128x256xf32> to vector<128x256xf32>
    %cst_22 = arith.constant dense<0.000000e+00> : vector<16x256xf32>
    %16 = tpu.matmul %13, %15, %cst_22 {dimension_numbers = #tpu.dot_dimension_numbers<[1], [0], [0], [1], [0, 0, 1, 1], [], []>} : vector<16x128xf32>, vector<128x256xf32>, vector<16x256xf32> -> vector<16x256xf32>
    %17 = vector.extract_strided_slice %16 {offsets = [0, 0], sizes = [16, 128], strides = [1, 1]} : vector<16x256xf32> to vector<16x128xf32>
    %18 = vector.extract_strided_slice %16 {offsets = [0, 128], sizes = [16, 128], strides = [1, 1]} : vector<16x256xf32> to vector<16x128xf32>
    %19 = arith.mulf %17, %1 : vector<16x128xf32>
    %cst_23 = arith.constant dense<0.000000e+00> : vector<128xf32>
    %20 = vector.multi_reduction <add>, %19, %cst_23 [0] : vector<16x128xf32> to vector<128xf32>
    %21 = vector.shape_cast %20 : vector<128xf32> to vector<1x128xf32>
    %22 = vector.broadcast %21 : vector<1x128xf32> to vector<16x128xf32>
    %23 = arith.addf %18, %22 : vector<16x128xf32>
    %cst_24 = arith.constant 2.000000e-01 : f32
    %24 = vector.broadcast %cst_24 : f32 to vector<16x128xf32>
    %25 = arith.mulf %24, %23 : vector<16x128xf32>
    %26 = arith.maximumf %23, %25 : vector<16x128xf32>
    %27 = arith.addf %26, %0 : vector<16x128xf32>
    %cst_25 = arith.constant dense<0xFF800000> : vector<16xf32>
    %28 = vector.multi_reduction <maximumf>, %27, %cst_25 [1] : vector<16x128xf32> to vector<16xf32>
    %29 = vector.shape_cast %28 : vector<16xf32> to vector<16x1xf32>
    %30 = vector.broadcast %29 : vector<16x1xf32> to vector<16x128xf32>
    %31 = arith.subf %27, %30 : vector<16x128xf32>
    %32 = math.exp %31 : vector<16x128xf32>
    %cst_26 = arith.constant dense<0.000000e+00> : vector<16x8xf32>
    %33 = tpu.matmul %32, %3, %cst_26 {dimension_numbers = #tpu.dot_dimension_numbers<[1], [0], [0], [1], [0, 0, 1, 1], [], []>} : vector<16x128xf32>, vector<128x8xf32>, vector<16x8xf32> -> vector<16x8xf32>
    %34 = tpu.reciprocal %33 {approx = true} : vector<16x8xf32> -> vector<16x8xf32>
    %cst_27 = arith.constant dense<0.000000e+00> : vector<16x128xf32>
    %35 = tpu.matmul %34, %2, %cst_27 {dimension_numbers = #tpu.dot_dimension_numbers<[1], [0], [0], [1], [0, 0, 1, 1], [], []>} : vector<16x8xf32>, vector<8x128xf32>, vector<16x128xf32> -> vector<16x128xf32>
    %36 = arith.mulf %32, %35 : vector<16x128xf32>
    %37 = tpu.concatenate %13, %13, %13, %13, %13, %13, %13, %13 in 0 : vector<16x128xf32>, vector<16x128xf32>, vector<16x128xf32>, vector<16x128xf32>, vector<16x128xf32>, vector<16x128xf32>, vector<16x128xf32>, vector<16x128xf32> -> vector<128x128xf32>
    %38 = arith.mulf %37, %4 : vector<128x128xf32>
    %cst_28 = arith.constant dense<0.000000e+00> : vector<16x128xf32>
    %39 = tpu.matmul %36, %38, %cst_28 {dimension_numbers = #tpu.dot_dimension_numbers<[1], [0], [0], [1], [0, 0, 1, 1], [], []>} : vector<16x128xf32>, vector<128x128xf32>, vector<16x128xf32> -> vector<16x128xf32>
    %c0_29 = arith.constant 0 : index
    %c0_30 = arith.constant 0 : index
    %c0_31 = arith.constant 0 : index
    %40 = vector.load %arg11[%c0_29, %c0_30, %c0_31] : memref<2x1x128xf32, #tpu.memory_space<vmem>>, vector<1x1x128xf32>
    %41 = vector.shape_cast %40 : vector<1x1x128xf32> to vector<1x128xf32>
    %42 = vector.broadcast %41 : vector<1x128xf32> to vector<16x128xf32>
    %43 = arith.addf %39, %42 : vector<16x128xf32>
    %44 = arith.addf %10, %43 : vector<16x128xf32>
    %c0_32 = arith.constant 0 : index
    %c0_33 = arith.constant 0 : index
    %c0_34 = arith.constant 0 : index
    %45 = vector.load %arg12[%c0_32, %c0_33, %c0_34] : memref<4x1x128xf32, #tpu.memory_space<vmem>>, vector<1x1x128xf32>
    %46 = vector.shape_cast %45 : vector<1x1x128xf32> to vector<1x128xf32>
    %47 = vector.broadcast %46 : vector<1x128xf32> to vector<16x128xf32>
    %48 = arith.mulf %44, %47 : vector<16x128xf32>
    %c0_35 = arith.constant 0 : index
    %c0_36 = arith.constant 0 : index
    %c0_37 = arith.constant 0 : index
    %49 = vector.load %arg13[%c0_35, %c0_36, %c0_37] : memref<4x1x128xf32, #tpu.memory_space<vmem>>, vector<1x1x128xf32>
    %50 = vector.shape_cast %49 : vector<1x1x128xf32> to vector<1x128xf32>
    %51 = vector.broadcast %50 : vector<1x128xf32> to vector<16x128xf32>
    %52 = arith.addf %48, %51 : vector<16x128xf32>
    %c0_38 = arith.constant 0 : index
    %c0_39 = arith.constant 0 : index
    %c0_40 = arith.constant 0 : index
    %53 = vector.load %arg14[%c0_38, %c0_39, %c0_40] : memref<2x128x256xf32, #tpu.memory_space<vmem>>, vector<1x128x256xf32>
    %54 = vector.shape_cast %53 : vector<1x128x256xf32> to vector<128x256xf32>
    %cst_41 = arith.constant dense<0.000000e+00> : vector<16x256xf32>
    %55 = tpu.matmul %52, %54, %cst_41 {dimension_numbers = #tpu.dot_dimension_numbers<[1], [0], [0], [1], [0, 0, 1, 1], [], []>} : vector<16x128xf32>, vector<128x256xf32>, vector<16x256xf32> -> vector<16x256xf32>
    %c0_42 = arith.constant 0 : index
    %c0_43 = arith.constant 0 : index
    %c0_44 = arith.constant 0 : index
    %56 = vector.load %arg15[%c0_42, %c0_43, %c0_44] : memref<2x1x256xf32, #tpu.memory_space<vmem>>, vector<1x1x256xf32>
    %57 = vector.shape_cast %56 : vector<1x1x256xf32> to vector<1x256xf32>
    %58 = vector.broadcast %57 : vector<1x256xf32> to vector<16x256xf32>
    %59 = arith.addf %55, %58 : vector<16x256xf32>
    %cst_45 = arith.constant 0.000000e+00 : f32
    %60 = vector.broadcast %cst_45 : f32 to vector<16x256xf32>
    %61 = arith.maximumf %59, %60 : vector<16x256xf32>
    %c0_46 = arith.constant 0 : index
    %c0_47 = arith.constant 0 : index
    %c0_48 = arith.constant 0 : index
    %62 = vector.load %arg16[%c0_46, %c0_47, %c0_48] : memref<2x256x128xf32, #tpu.memory_space<vmem>>, vector<1x256x128xf32>
    %63 = vector.shape_cast %62 : vector<1x256x128xf32> to vector<256x128xf32>
    %cst_49 = arith.constant dense<0.000000e+00> : vector<16x128xf32>
    %64 = tpu.matmul %61, %63, %cst_49 {dimension_numbers = #tpu.dot_dimension_numbers<[1], [0], [0], [1], [0, 0, 1, 1], [], []>} : vector<16x256xf32>, vector<256x128xf32>, vector<16x128xf32> -> vector<16x128xf32>
    %c0_50 = arith.constant 0 : index
    %c0_51 = arith.constant 0 : index
    %c0_52 = arith.constant 0 : index
    %65 = vector.load %arg17[%c0_50, %c0_51, %c0_52] : memref<2x1x128xf32, #tpu.memory_space<vmem>>, vector<1x1x128xf32>
    %66 = vector.shape_cast %65 : vector<1x1x128xf32> to vector<1x128xf32>
    %67 = vector.broadcast %66 : vector<1x128xf32> to vector<16x128xf32>
    %68 = arith.addf %64, %67 : vector<16x128xf32>
    %69 = arith.addf %52, %68 : vector<16x128xf32>
    %c1 = arith.constant 1 : index
    %c0_53 = arith.constant 0 : index
    %c0_54 = arith.constant 0 : index
    %70 = vector.load %arg12[%c1, %c0_53, %c0_54] : memref<4x1x128xf32, #tpu.memory_space<vmem>>, vector<1x1x128xf32>
    %71 = vector.shape_cast %70 : vector<1x1x128xf32> to vector<1x128xf32>
    %72 = vector.broadcast %71 : vector<1x128xf32> to vector<16x128xf32>
    %73 = arith.mulf %69, %72 : vector<16x128xf32>
    %c1_55 = arith.constant 1 : index
    %c0_56 = arith.constant 0 : index
    %c0_57 = arith.constant 0 : index
    %74 = vector.load %arg13[%c1_55, %c0_56, %c0_57] : memref<4x1x128xf32, #tpu.memory_space<vmem>>, vector<1x1x128xf32>
    %75 = vector.shape_cast %74 : vector<1x1x128xf32> to vector<1x128xf32>
    %76 = vector.broadcast %75 : vector<1x128xf32> to vector<16x128xf32>
    %77 = arith.addf %73, %76 : vector<16x128xf32>
    %c1_58 = arith.constant 1 : index
    %c0_59 = arith.constant 0 : index
    %c0_60 = arith.constant 0 : index
    %78 = vector.load %arg9[%c1_58, %c0_59, %c0_60] : memref<2x128x128xf32, #tpu.memory_space<vmem>>, vector<1x128x128xf32>
    %79 = vector.shape_cast %78 : vector<1x128x128xf32> to vector<128x128xf32>
    %cst_61 = arith.constant dense<0.000000e+00> : vector<16x128xf32>
    %80 = tpu.matmul %77, %79, %cst_61 {dimension_numbers = #tpu.dot_dimension_numbers<[1], [0], [0], [1], [0, 0, 1, 1], [], []>} : vector<16x128xf32>, vector<128x128xf32>, vector<16x128xf32> -> vector<16x128xf32>
    %c1_62 = arith.constant 1 : index
    %c0_63 = arith.constant 0 : index
    %c0_64 = arith.constant 0 : index
    %81 = vector.load %arg10[%c1_62, %c0_63, %c0_64] : memref<2x128x256xf32, #tpu.memory_space<vmem>>, vector<1x128x256xf32>
    %82 = vector.shape_cast %81 : vector<1x128x256xf32> to vector<128x256xf32>
    %cst_65 = arith.constant dense<0.000000e+00> : vector<16x256xf32>
    %83 = tpu.matmul %80, %82, %cst_65 {dimension_numbers = #tpu.dot_dimension_numbers<[1], [0], [0], [1], [0, 0, 1, 1], [], []>} : vector<16x128xf32>, vector<128x256xf32>, vector<16x256xf32> -> vector<16x256xf32>
    %84 = vector.extract_strided_slice %83 {offsets = [0, 0], sizes = [16, 128], strides = [1, 1]} : vector<16x256xf32> to vector<16x128xf32>
    %85 = vector.extract_strided_slice %83 {offsets = [0, 128], sizes = [16, 128], strides = [1, 1]} : vector<16x256xf32> to vector<16x128xf32>
    %86 = arith.mulf %84, %1 : vector<16x128xf32>
    %cst_66 = arith.constant dense<0.000000e+00> : vector<128xf32>
    %87 = vector.multi_reduction <add>, %86, %cst_66 [0] : vector<16x128xf32> to vector<128xf32>
    %88 = vector.shape_cast %87 : vector<128xf32> to vector<1x128xf32>
    %89 = vector.broadcast %88 : vector<1x128xf32> to vector<16x128xf32>
    %90 = arith.addf %85, %89 : vector<16x128xf32>
    %cst_67 = arith.constant 2.000000e-01 : f32
    %91 = vector.broadcast %cst_67 : f32 to vector<16x128xf32>
    %92 = arith.mulf %91, %90 : vector<16x128xf32>
    %93 = arith.maximumf %90, %92 : vector<16x128xf32>
    %94 = arith.addf %93, %0 : vector<16x128xf32>
    %cst_68 = arith.constant dense<0xFF800000> : vector<16xf32>
    %95 = vector.multi_reduction <maximumf>, %94, %cst_68 [1] : vector<16x128xf32> to vector<16xf32>
    %96 = vector.shape_cast %95 : vector<16xf32> to vector<16x1xf32>
    %97 = vector.broadcast %96 : vector<16x1xf32> to vector<16x128xf32>
    %98 = arith.subf %94, %97 : vector<16x128xf32>
    %99 = math.exp %98 : vector<16x128xf32>
    %cst_69 = arith.constant dense<0.000000e+00> : vector<16x8xf32>
    %100 = tpu.matmul %99, %3, %cst_69 {dimension_numbers = #tpu.dot_dimension_numbers<[1], [0], [0], [1], [0, 0, 1, 1], [], []>} : vector<16x128xf32>, vector<128x8xf32>, vector<16x8xf32> -> vector<16x8xf32>
    %101 = tpu.reciprocal %100 {approx = true} : vector<16x8xf32> -> vector<16x8xf32>
    %cst_70 = arith.constant dense<0.000000e+00> : vector<16x128xf32>
    %102 = tpu.matmul %101, %2, %cst_70 {dimension_numbers = #tpu.dot_dimension_numbers<[1], [0], [0], [1], [0, 0, 1, 1], [], []>} : vector<16x8xf32>, vector<8x128xf32>, vector<16x128xf32> -> vector<16x128xf32>
    %103 = arith.mulf %99, %102 : vector<16x128xf32>
    %104 = tpu.concatenate %80, %80, %80, %80, %80, %80, %80, %80 in 0 : vector<16x128xf32>, vector<16x128xf32>, vector<16x128xf32>, vector<16x128xf32>, vector<16x128xf32>, vector<16x128xf32>, vector<16x128xf32>, vector<16x128xf32> -> vector<128x128xf32>
    %105 = arith.mulf %104, %4 : vector<128x128xf32>
    %cst_71 = arith.constant dense<0.000000e+00> : vector<16x128xf32>
    %106 = tpu.matmul %103, %105, %cst_71 {dimension_numbers = #tpu.dot_dimension_numbers<[1], [0], [0], [1], [0, 0, 1, 1], [], []>} : vector<16x128xf32>, vector<128x128xf32>, vector<16x128xf32> -> vector<16x128xf32>
    %c1_72 = arith.constant 1 : index
    %c0_73 = arith.constant 0 : index
    %c0_74 = arith.constant 0 : index
    %107 = vector.load %arg11[%c1_72, %c0_73, %c0_74] : memref<2x1x128xf32, #tpu.memory_space<vmem>>, vector<1x1x128xf32>
    %108 = vector.shape_cast %107 : vector<1x1x128xf32> to vector<1x128xf32>
    %109 = vector.broadcast %108 : vector<1x128xf32> to vector<16x128xf32>
    %110 = arith.addf %106, %109 : vector<16x128xf32>
    %111 = arith.addf %77, %110 : vector<16x128xf32>
    %c2 = arith.constant 2 : index
    %c0_75 = arith.constant 0 : index
    %c0_76 = arith.constant 0 : index
    %112 = vector.load %arg12[%c2, %c0_75, %c0_76] : memref<4x1x128xf32, #tpu.memory_space<vmem>>, vector<1x1x128xf32>
    %113 = vector.shape_cast %112 : vector<1x1x128xf32> to vector<1x128xf32>
    %114 = vector.broadcast %113 : vector<1x128xf32> to vector<16x128xf32>
    %115 = arith.mulf %111, %114 : vector<16x128xf32>
    %c2_77 = arith.constant 2 : index
    %c0_78 = arith.constant 0 : index
    %c0_79 = arith.constant 0 : index
    %116 = vector.load %arg13[%c2_77, %c0_78, %c0_79] : memref<4x1x128xf32, #tpu.memory_space<vmem>>, vector<1x1x128xf32>
    %117 = vector.shape_cast %116 : vector<1x1x128xf32> to vector<1x128xf32>
    %118 = vector.broadcast %117 : vector<1x128xf32> to vector<16x128xf32>
    %119 = arith.addf %115, %118 : vector<16x128xf32>
    %c1_80 = arith.constant 1 : index
    %c0_81 = arith.constant 0 : index
    %c0_82 = arith.constant 0 : index
    %120 = vector.load %arg14[%c1_80, %c0_81, %c0_82] : memref<2x128x256xf32, #tpu.memory_space<vmem>>, vector<1x128x256xf32>
    %121 = vector.shape_cast %120 : vector<1x128x256xf32> to vector<128x256xf32>
    %cst_83 = arith.constant dense<0.000000e+00> : vector<16x256xf32>
    %122 = tpu.matmul %119, %121, %cst_83 {dimension_numbers = #tpu.dot_dimension_numbers<[1], [0], [0], [1], [0, 0, 1, 1], [], []>} : vector<16x128xf32>, vector<128x256xf32>, vector<16x256xf32> -> vector<16x256xf32>
    %c1_84 = arith.constant 1 : index
    %c0_85 = arith.constant 0 : index
    %c0_86 = arith.constant 0 : index
    %123 = vector.load %arg15[%c1_84, %c0_85, %c0_86] : memref<2x1x256xf32, #tpu.memory_space<vmem>>, vector<1x1x256xf32>
    %124 = vector.shape_cast %123 : vector<1x1x256xf32> to vector<1x256xf32>
    %125 = vector.broadcast %124 : vector<1x256xf32> to vector<16x256xf32>
    %126 = arith.addf %122, %125 : vector<16x256xf32>
    %cst_87 = arith.constant 0.000000e+00 : f32
    %127 = vector.broadcast %cst_87 : f32 to vector<16x256xf32>
    %128 = arith.maximumf %126, %127 : vector<16x256xf32>
    %c1_88 = arith.constant 1 : index
    %c0_89 = arith.constant 0 : index
    %c0_90 = arith.constant 0 : index
    %129 = vector.load %arg16[%c1_88, %c0_89, %c0_90] : memref<2x256x128xf32, #tpu.memory_space<vmem>>, vector<1x256x128xf32>
    %130 = vector.shape_cast %129 : vector<1x256x128xf32> to vector<256x128xf32>
    %cst_91 = arith.constant dense<0.000000e+00> : vector<16x128xf32>
    %131 = tpu.matmul %128, %130, %cst_91 {dimension_numbers = #tpu.dot_dimension_numbers<[1], [0], [0], [1], [0, 0, 1, 1], [], []>} : vector<16x256xf32>, vector<256x128xf32>, vector<16x128xf32> -> vector<16x128xf32>
    %c1_92 = arith.constant 1 : index
    %c0_93 = arith.constant 0 : index
    %c0_94 = arith.constant 0 : index
    %132 = vector.load %arg17[%c1_92, %c0_93, %c0_94] : memref<2x1x128xf32, #tpu.memory_space<vmem>>, vector<1x1x128xf32>
    %133 = vector.shape_cast %132 : vector<1x1x128xf32> to vector<1x128xf32>
    %134 = vector.broadcast %133 : vector<1x128xf32> to vector<16x128xf32>
    %135 = arith.addf %131, %134 : vector<16x128xf32>
    %136 = arith.addf %119, %135 : vector<16x128xf32>
    %c3 = arith.constant 3 : index
    %c0_95 = arith.constant 0 : index
    %c0_96 = arith.constant 0 : index
    %137 = vector.load %arg12[%c3, %c0_95, %c0_96] : memref<4x1x128xf32, #tpu.memory_space<vmem>>, vector<1x1x128xf32>
    %138 = vector.shape_cast %137 : vector<1x1x128xf32> to vector<1x128xf32>
    %139 = vector.broadcast %138 : vector<1x128xf32> to vector<16x128xf32>
    %140 = arith.mulf %136, %139 : vector<16x128xf32>
    %c3_97 = arith.constant 3 : index
    %c0_98 = arith.constant 0 : index
    %c0_99 = arith.constant 0 : index
    %141 = vector.load %arg13[%c3_97, %c0_98, %c0_99] : memref<4x1x128xf32, #tpu.memory_space<vmem>>, vector<1x1x128xf32>
    %142 = vector.shape_cast %141 : vector<1x1x128xf32> to vector<1x128xf32>
    %143 = vector.broadcast %142 : vector<1x128xf32> to vector<16x128xf32>
    %144 = arith.addf %140, %143 : vector<16x128xf32>
    %cst_100 = arith.constant dense<0.000000e+00> : vector<128xf32>
    %145 = vector.multi_reduction <add>, %144, %cst_100 [0] : vector<16x128xf32> to vector<128xf32>
    %146 = vector.shape_cast %145 : vector<128xf32> to vector<1x128xf32>
    %cst_101 = arith.constant 6.250000e-02 : f32
    %147 = vector.broadcast %cst_101 : f32 to vector<1x128xf32>
    %148 = arith.mulf %146, %147 : vector<1x128xf32>
    %c0_102 = arith.constant 0 : index
    %c0_103 = arith.constant 0 : index
    %149 = vector.load %arg18[%c0_102, %c0_103] : memref<128x64xf32, #tpu.memory_space<vmem>>, vector<128x64xf32>
    %cst_104 = arith.constant dense<0.000000e+00> : vector<1x64xf32>
    %150 = tpu.matmul %148, %149, %cst_104 {dimension_numbers = #tpu.dot_dimension_numbers<[1], [0], [0], [1], [0, 0, 1, 1], [], []>} : vector<1x128xf32>, vector<128x64xf32>, vector<1x64xf32> -> vector<1x64xf32>
    %c0_105 = arith.constant 0 : index
    %c0_106 = arith.constant 0 : index
    %151 = vector.load %arg2[%c0_105, %c0_106] : memref<1x8xf32, #tpu.memory_space<vmem>>, vector<1x8xf32>
    %c0_107 = arith.constant 0 : index
    %c0_108 = arith.constant 0 : index
    %152 = vector.load %arg19[%c0_107, %c0_108] : memref<8x64xf32, #tpu.memory_space<vmem>>, vector<8x64xf32>
    %cst_109 = arith.constant dense<0.000000e+00> : vector<1x64xf32>
    %153 = tpu.matmul %151, %152, %cst_109 {dimension_numbers = #tpu.dot_dimension_numbers<[1], [0], [0], [1], [0, 0, 1, 1], [], []>} : vector<1x8xf32>, vector<8x64xf32>, vector<1x64xf32> -> vector<1x64xf32>
    %154 = arith.addf %150, %153 : vector<1x64xf32>
    %c0_110 = arith.constant 0 : index
    %c0_111 = arith.constant 0 : index
    %155 = vector.load %arg20[%c0_110, %c0_111] : memref<1x64xf32, #tpu.memory_space<vmem>>, vector<1x64xf32>
    %156 = arith.addf %154, %155 : vector<1x64xf32>
    %cst_112 = arith.constant 0.000000e+00 : f32
    %157 = vector.broadcast %cst_112 : f32 to vector<1x64xf32>
    %158 = arith.maximumf %156, %157 : vector<1x64xf32>
    %c0_113 = arith.constant 0 : index
    %c0_114 = arith.constant 0 : index
    %159 = vector.load %arg21[%c0_113, %c0_114] : memref<64x32xf32, #tpu.memory_space<vmem>>, vector<64x32xf32>
    %cst_115 = arith.constant dense<0.000000e+00> : vector<1x32xf32>
    %160 = tpu.matmul %158, %159, %cst_115 {dimension_numbers = #tpu.dot_dimension_numbers<[1], [0], [0], [1], [0, 0, 1, 1], [], []>} : vector<1x64xf32>, vector<64x32xf32>, vector<1x32xf32> -> vector<1x32xf32>
    %c0_116 = arith.constant 0 : index
    %c0_117 = arith.constant 0 : index
    %161 = vector.load %arg22[%c0_116, %c0_117] : memref<1x32xf32, #tpu.memory_space<vmem>>, vector<1x32xf32>
    %162 = arith.addf %160, %161 : vector<1x32xf32>
    %cst_118 = arith.constant 0.000000e+00 : f32
    %163 = vector.broadcast %cst_118 : f32 to vector<1x32xf32>
    %164 = arith.maximumf %162, %163 : vector<1x32xf32>
    %c0_119 = arith.constant 0 : index
    %c0_120 = arith.constant 0 : index
    %165 = vector.load %arg23[%c0_119, %c0_120] : memref<1x32xf32, #tpu.memory_space<vmem>>, vector<1x32xf32>
    %166 = arith.mulf %164, %165 : vector<1x32xf32>
    %cst_121 = arith.constant dense<0.000000e+00> : vector<1xf32>
    %167 = vector.multi_reduction <add>, %166, %cst_121 [1] : vector<1x32xf32> to vector<1xf32>
    %168 = vector.shape_cast %167 : vector<1xf32> to vector<1x1xf32>
    %c0_122 = arith.constant 0 : index
    %c0_123 = arith.constant 0 : index
    %169 = vector.load %arg24[%c0_122, %c0_123] : memref<1x1xf32, #tpu.memory_space<vmem>>, vector<1x1xf32>
    %170 = arith.addf %168, %169 : vector<1x1xf32>
    %c0_124 = arith.constant 0 : index
    %c0_125 = arith.constant 0 : index
    %171 = vector.load %arg25[%c0_124, %c0_125] : memref<1x1xf32, #tpu.memory_space<vmem>>, vector<1x1xf32>
    tpu.vector_store %arg25[%c0_124, %c0_125], %170 {strides = array<i32>} : memref<1x1xf32, #tpu.memory_space<vmem>>, vector<1x1xf32>,
    return
  }
}

</mosaic_0001>

<llo_original>
// kernel: tpu_custom_call.1
$region0: #{tpu_custom_call.1}
  #allocation0 [shape = 'u32[]', space=smem, size = 0x4, offset = 0x4, fixed_abs, tag = 'smem constant byte address 0x4 - core index']
  #allocation1 [shape = 'u32[144,128]{1,0:T(1,128)}', space=vmem, size = 0x12000, scoped, tag = 'internal scratch']
  #allocation2 [shape = 'f32[1,1]{1,0:T(1,128)S(1)}', space=vmem, size = 0x200, scoped, tag = 'scoped memory for tpu_custom_call.1']
  %s0 = inlined_call_operand.vmem [shape: f32[16,8], index: 0, kind: input, shape index: {}]
  %s1 = inlined_call_operand.hbm [shape: f32[16,128], index: 1, kind: input, shape index: {}]
  %s2 = inlined_call_operand.hbm [shape: f32[1,8], index: 2, kind: input, shape index: {}]
  %s3 = inlined_call_operand.hbm [shape: f32[8,128], index: 3, kind: input, shape index: {}]
  %s4 = inlined_call_operand.vmem [shape: f32[128,8], index: 4, kind: input, shape index: {}]
  %s5 = inlined_call_operand.hbm [shape: f32[128,128], index: 5, kind: input, shape index: {}]
  %s6 = inlined_call_operand.hbm [shape: f32[16,128], index: 6, kind: input, shape index: {}]
  %s7 = inlined_call_operand.hbm [shape: f32[8,128], index: 7, kind: input, shape index: {}]
  %s8 = inlined_call_operand.hbm [shape: f32[1,128], index: 8, kind: input, shape index: {}]
  %s9 = inlined_call_operand.hbm [shape: f32[2,128,128], index: 9, kind: input, shape index: {}]
  %s10 = inlined_call_operand.hbm [shape: f32[2,128,256], index: 10, kind: input, shape index: {}]
  %s11 = inlined_call_operand.hbm [shape: f32[2,1,128], index: 11, kind: input, shape index: {}]
  %s12 = inlined_call_operand.hbm [shape: f32[4,1,128], index: 12, kind: input, shape index: {}]
  %s13 = inlined_call_operand.hbm [shape: f32[4,1,128], index: 13, kind: input, shape index: {}]
  %s14 = inlined_call_operand.hbm [shape: f32[2,128,256], index: 14, kind: input, shape index: {}]
  %s15 = inlined_call_operand.hbm [shape: f32[2,1,256], index: 15, kind: input, shape index: {}]
  %s16 = inlined_call_operand.vmem [shape: f32[2,256,128], index: 16, kind: input, shape index: {}]
  %s17 = inlined_call_operand.vmem [shape: f32[2,1,128], index: 17, kind: input, shape index: {}]
  %s18 = inlined_call_operand.vmem [shape: f32[128,64], index: 18, kind: input, shape index: {}]
  %s19 = inlined_call_operand.vmem [shape: f32[8,64], index: 19, kind: input, shape index: {}]
  %s20 = inlined_call_operand.vmem [shape: f32[1,64], index: 20, kind: input, shape index: {}]
  %s21 = inlined_call_operand.vmem [shape: f32[64,32], index: 21, kind: input, shape index: {}]
  %s22 = inlined_call_operand.vmem [shape: f32[1,32], index: 22, kind: input, shape index: {}]
  %s23 = inlined_call_operand.vmem [shape: f32[1,32], index: 23, kind: input, shape index: {}]
  %s24 = inlined_call_operand.<no memory space> [shape: f32[1,1], index: 24, kind: input, shape index: {}]
  %s25 = inlined_call_operand.hbm [shape: f32[1,1], index: 25, kind: output, shape index: {}]
  %s26 = sld [smem:[#allocation0]]
  $region166: #{tpu_custom_call.1} parent=0
    _
  %s28 = ssub.s32 1, %s26
  %s29 = scalar_select 0, %s28, %s26
  %v30 = vstv %s24
  %31 = vst [vmem:[#allocation2] sm:$0x1] %v30
  $region1: #{tpu_custom_call.1} parent=0
    #allocation3 [shape = 'u8[8192]{0}', space=vmem, size = 0x2000, scoped, tag = 'input window, operand 1, single buffered']
    #allocation4 [shape = 's32[1]{0}', space=sflag, size = 0x4, scoped, tag = 'scoped memory for tpu_custom_call.1']
    #allocation5 [shape = 's32[1]{0}', space=sflag, size = 0x4, scoped, tag = 'scoped memory for tpu_custom_call.1']
    #allocation6 [shape = 'u8[512]{0}', space=vmem, size = 0x400, scoped, tag = 'input window, operand 2, single buffered']
    #allocation7 [shape = 's32[1]{0}', space=sflag, size = 0x4, scoped, tag = 'scoped memory for tpu_custom_call.1']
    #allocation8 [shape = 'u8[4096]{0}', space=vmem, size = 0x1000, scoped, tag = 'input window, operand 3, single buffered']
    #allocation9 [shape = 'u8[65536]{0}', space=vmem, size = 0x10000, scoped, tag = 'input window, operand 5, single buffered']
    #allocation10 [shape = 's32[1]{0}', space=sflag, size = 0x4, scoped, tag = 'scoped memory for tpu_custom_call.1']
    #allocation11 [shape = 'u8[8192]{0}', space=vmem, size = 0x2000, scoped, tag = 'input window, operand 6, single buffered']
    #allocation12 [shape = 'u8[4096]{0}', space=vmem, size = 0x1000, scoped, tag = 'input window, operand 7, single buffered']
    #allocation13 [shape = 's32[1]{0}', space=sflag, size = 0x4, scoped, tag = 'scoped memory for tpu_custom_call.1']
    #allocation14 [shape = 'u8[512]{0}', space=vmem, size = 0x400, scoped, tag = 'input window, operand 8, single buffered']
    #allocation15 [shape = 'u8[131072]{0}', space=vmem, size = 0x20000, scoped, tag = 'input window, operand 9, single buffered']
    #allocation16 [shape = 's32[1]{0}', space=sflag, size = 0x4, scoped, tag = 'scoped memory for tpu_custom_call.1']
    #allocation17 [shape = 'u8[262144]{0}', space=vmem, size = 0x40000, scoped, tag = 'input window, operand 10, single buffered']
    #allocation18 [shape = 'u8[1024]{0}', space=vmem, size = 0x400, scoped, tag = 'input window, operand 11, single buffered']
    #allocation19 [shape = 's32[1]{0}', space=sflag, size = 0x4, scoped, tag = 'scoped memory for tpu_custom_call.1']
    #allocation20 [shape = 'u8[2048]{0}', space=vmem, size = 0x800, scoped, tag = 'input window, operand 12, single buffered']
    #allocation21 [shape = 'u8[2048]{0}', space=vmem, size = 0x800, scoped, tag = 'input window, operand 13, single buffered']
    #allocation22 [shape = 's32[1]{0}', space=sflag, size = 0x4, scoped, tag = 'scoped memory for tpu_custom_call.1']
    #allocation23 [shape = 'u8[262144]{0}', space=vmem, size = 0x40000, scoped, tag = 'input window, operand 14, single buffered']
    #allocation24 [shape = 'u8[2048]{0}', space=vmem, size = 0x800, scoped, tag = 'input window, operand 15, single buffered']
    #allocation25 [shape = 's32[1]{0}', space=sflag, size = 0x4, scoped, tag = 'scoped memory for tpu_custom_call.1']
    #allocation26 [shape = 'u8[512]{0}', space=vmem, size = 0x400, scoped, tag = 'output window, operand 0, single buffered']
    %32 = vsyncpa [#allocation4], 0
    %33 = vsyncpa [#allocation7], 0
    %34 = vsyncpa [#allocation10], 0
    %35 = vsyncpa [#allocation13], 0
    %36 = vsyncpa [#allocation16], 0
    %37 = vsyncpa [#allocation19], 0
    %38 = vsyncpa [#allocation22], 0
    %39 = vsyncpa [#allocation25], 0
    %40 = vsyncpa [#allocation5], 0
    // Predicated region
    $region2: #{tpu_custom_call.1} parent=1 // pred_check
      _
    $region3: #{tpu_custom_call.1} parent=1 // pred_check_branch
      %42 = sbr.rel (0) target = $region5
    $region4: #{tpu_custom_call.1} parent=1 // pred_region
      _
    $region5: #{tpu_custom_call.1} parent=1 // pred_fallthru
      _
    // Predicated region
    $region6: #{tpu_custom_call.1} parent=1 // pred_check
      _
    $region7: #{tpu_custom_call.1} parent=1 // pred_check_branch
      %44 = sbr.rel (0) target = $region9
    $region8: #{tpu_custom_call.1} parent=1 // pred_region
      %s46 = ssub.s32 256, 256
      %47 = vsyncadd [#allocation4], %s46
      %s48 = sshll.u32 [#allocation3], 4
      %s49 = int_to_ptr.vmem [resolvable:$true] %s48
      %54 = dma.hbm_to_vmem [thread:$0]  %s1, 256, %s49, [#allocation4], 128, 128, 8
    $region9: #{tpu_custom_call.1} parent=1 // pred_fallthru
      _
    // Predicated region
    $region10: #{tpu_custom_call.1} parent=1 // pred_check
      _
    $region11: #{tpu_custom_call.1} parent=1 // pred_check_branch
      %56 = sbr.rel (0) target = $region13
    $region12: #{tpu_custom_call.1} parent=1 // pred_region
      %s58 = ssub.s32 16, 16
      %59 = vsyncadd [#allocation7], %s58
      %s61 = sshll.u32 [#allocation6], 4
      %s62 = int_to_ptr.vmem [resolvable:$true] %s61
      %64 = dma.hbm_to_vmem [thread:$0]  %s2, 16, %s62, [#allocation7]
    $region13: #{tpu_custom_call.1} parent=1 // pred_fallthru
      _
    // Predicated region
    $region14: #{tpu_custom_call.1} parent=1 // pred_check
      _
    $region15: #{tpu_custom_call.1} parent=1 // pred_check_branch
      %66 = sbr.rel (0) target = $region17
    $region16: #{tpu_custom_call.1} parent=1 // pred_region
      %s68 = ssub.s32 128, 128
      %69 = vsyncadd [#allocation7], %s68
      %s71 = sshll.u32 [#allocation8], 4
      %s72 = int_to_ptr.vmem [resolvable:$true] %s71
      %74 = dma.hbm_to_vmem [thread:$0]  %s3, 128, %s72, [#allocation7]
    $region17: #{tpu_custom_call.1} parent=1 // pred_fallthru
      _
    // Predicated region
    $region18: #{tpu_custom_call.1} parent=1 // pred_check
      _
    $region19: #{tpu_custom_call.1} parent=1 // pred_check_branch
      %76 = sbr.rel (0) target = $region21
    $region20: #{tpu_custom_call.1} parent=1 // pred_region
      _
    $region21: #{tpu_custom_call.1} parent=1 // pred_fallthru
      _
    // Predicated region
    $region22: #{tpu_custom_call.1} parent=1 // pred_check
      _
    $region23: #{tpu_custom_call.1} parent=1 // pred_check_branch
      %78 = sbr.rel (0) target = $region25
    $region24: #{tpu_custom_call.1} parent=1 // pred_region
      %s80 = ssub.s32 2048, 2048
      %81 = vsyncadd [#allocation10], %s80
      %s82 = sshll.u32 [#allocation9], 4
      %s83 = int_to_ptr.vmem [resolvable:$true] %s82
      %88 = dma.hbm_to_vmem [thread:$0]  %s5, 2048, %s83, [#allocation10], 128, 128, 8
    $region25: #{tpu_custom_call.1} parent=1 // pred_fallthru
      _
    // Predicated region
    $region26: #{tpu_custom_call.1} parent=1 // pred_check
      _
    $region27: #{tpu_custom_call.1} parent=1 // pred_check_branch
      %90 = sbr.rel (0) target = $region29
    $region28: #{tpu_custom_call.1} parent=1 // pred_region
      %s92 = ssub.s32 256, 256
      %93 = vsyncadd [#allocation10], %s92
      %s94 = sshll.u32 [#allocation11], 4
      %s95 = int_to_ptr.vmem [resolvable:$true] %s94
      %100 = dma.hbm_to_vmem [thread:$0]  %s6, 256, %s95, [#allocation10], 128, 128, 8
    $region29: #{tpu_custom_call.1} parent=1 // pred_fallthru
      _
    // Predicated region
    $region30: #{tpu_custom_call.1} parent=1 // pred_check
      _
    $region31: #{tpu_custom_call.1} parent=1 // pred_check_branch
      %102 = sbr.rel (0) target = $region33
    $region32: #{tpu_custom_call.1} parent=1 // pred_region
      %s104 = ssub.s32 128, 128
      %105 = vsyncadd [#allocation13], %s104
      %s107 = sshll.u32 [#allocation12], 4
      %s108 = int_to_ptr.vmem [resolvable:$true] %s107
      %110 = dma.hbm_to_vmem [thread:$0]  %s7, 128, %s108, [#allocation13]
    $region33: #{tpu_custom_call.1} parent=1 // pred_fallthru
      _
    // Predicated region
    $region34: #{tpu_custom_call.1} parent=1 // pred_check
      _
    $region35: #{tpu_custom_call.1} parent=1 // pred_check_branch
      %112 = sbr.rel (0) target = $region37
    $region36: #{tpu_custom_call.1} parent=1 // pred_region
      %s114 = ssub.s32 16, 16
      %115 = vsyncadd [#allocation13], %s114
      %s117 = sshll.u32 [#allocation14], 4
      %s118 = int_to_ptr.vmem [resolvable:$true] %s117
      %120 = dma.hbm_to_vmem [thread:$0]  %s8, 16, %s118, [#allocation13]
    $region37: #{tpu_custom_call.1} parent=1 // pred_fallthru
      _
    // Predicated region
    $region38: #{tpu_custom_call.1} parent=1 // pred_check
      _
    $region39: #{tpu_custom_call.1} parent=1 // pred_check_branch
      %122 = sbr.rel (0) target = $region41
    $region40: #{tpu_custom_call.1} parent=1 // pred_region
      %s124 = ssub.s32 4096, 4096
      %125 = vsyncadd [#allocation16], %s124
      %s126 = sshll.u32 [#allocation15], 4
      %s127 = int_to_ptr.vmem [resolvable:$true] %s126
      %132 = dma.hbm_to_vmem [thread:$0]  %s9, 4096, %s127, [#allocation16], 128, 128, 8
    $region41: #{tpu_custom_call.1} parent=1 // pred_fallthru
      _
    // Predicated region
    $region42: #{tpu_custom_call.1} parent=1 // pred_check
      _
    $region43: #{tpu_custom_call.1} parent=1 // pred_check_branch
      %134 = sbr.rel (0) target = $region45
    $region44: #{tpu_custom_call.1} parent=1 // pred_region
      %s136 = ssub.s32 8192, 8192
      %137 = vsyncadd [#allocation16], %s136
      %s138 = sshll.u32 [#allocation17], 4
      %s139 = int_to_ptr.vmem [resolvable:$true] %s138
      %144 = dma.hbm_to_vmem [thread:$0]  %s10, 8192, %s139, [#allocation16], 256, 256, 16
    $region45: #{tpu_custom_call.1} parent=1 // pred_fallthru
      _
    // Predicated region
    $region46: #{tpu_custom_call.1} parent=1 // pred_check
      _
    $region47: #{tpu_custom_call.1} parent=1 // pred_check_branch
      %146 = sbr.rel (0) target = $region49
    $region48: #{tpu_custom_call.1} parent=1 // pred_region
      %s148 = ssub.s32 32, 32
      %149 = vsyncadd [#allocation19], %s148
      %s150 = sshll.u32 [#allocation18], 4
      %s151 = int_to_ptr.vmem [resolvable:$true] %s150
      %156 = dma.hbm_to_vmem [thread:$0]  %s11, 32, %s151, [#allocation19], 16, 16, 1
    $region49: #{tpu_custom_call.1} parent=1 // pred_fallthru
      _
    // Predicated region
    $region50: #{tpu_custom_call.1} parent=1 // pred_check
      _
    $region51: #{tpu_custom_call.1} parent=1 // pred_check_branch
      %158 = sbr.rel (0) target = $region53
    $region52: #{tpu_custom_call.1} parent=1 // pred_region
      %s160 = ssub.s32 64, 64
      %161 = vsyncadd [#allocation19], %s160
      %s162 = sshll.u32 [#allocation20], 4
      %s163 = int_to_ptr.vmem [resolvable:$true] %s162
      %168 = dma.hbm_to_vmem [thread:$0]  %s12, 64, %s163, [#allocation19], 16, 16, 1
    $region53: #{tpu_custom_call.1} parent=1 // pred_fallthru
      _
    // Predicated region
    $region54: #{tpu_custom_call.1} parent=1 // pred_check
      _
    $region55: #{tpu_custom_call.1} parent=1 // pred_check_branch
      %170 = sbr.rel (0) target = $region57
    $region56: #{tpu_custom_call.1} parent=1 // pred_region
      %s172 = ssub.s32 64, 64
      %173 = vsyncadd [#allocation22], %s172
      %s174 = sshll.u32 [#allocation21], 4
      %s175 = int_to_ptr.vmem [resolvable:$true] %s174
      %180 = dma.hbm_to_vmem [thread:$0]  %s13, 64, %s175, [#allocation22], 16, 16, 1
    $region57: #{tpu_custom_call.1} parent=1 // pred_fallthru
      _
    // Predicated region
    $region58: #{tpu_custom_call.1} parent=1 // pred_check
      _
    $region59: #{tpu_custom_call.1} parent=1 // pred_check_branch
      %182 = sbr.rel (0) target = $region61
    $region60: #{tpu_custom_call.1} parent=1 // pred_region
      %s184 = ssub.s32 8192, 8192
      %185 = vsyncadd [#allocation22], %s184
      %s186 = sshll.u32 [#allocation23], 4
      %s187 = int_to_ptr.vmem [resolvable:$true] %s186
      %192 = dma.hbm_to_vmem [thread:$0]  %s14, 8192, %s187, [#allocation22], 256, 256, 16
    $region61: #{tpu_custom_call.1} parent=1 // pred_fallthru
      _
    // Predicated region
    $region62: #{tpu_custom_call.1} parent=1 // pred_check
      _
    $region63: #{tpu_custom_call.1} parent=1 // pred_check_branch
      %194 = sbr.rel (0) target = $region65
    $region64: #{tpu_custom_call.1} parent=1 // pred_region
      %s196 = ssub.s32 64, 64
      %197 = vsyncadd [#allocation25], %s196
      %s198 = sshll.u32 [#allocation24], 4
      %s199 = int_to_ptr.vmem [resolvable:$true] %s198
      %204 = dma.hbm_to_vmem [thread:$0]  %s15, 64, %s199, [#allocation25], 32, 32, 2
    $region65: #{tpu_custom_call.1} parent=1 // pred_fallthru
      _
    // Predicated region
    $region66: #{tpu_custom_call.1} parent=1 // pred_check
      _
    $region67: #{tpu_custom_call.1} parent=1 // pred_check_branch
      %206 = sbr.rel (0) target = $region69
    $region68: #{tpu_custom_call.1} parent=1 // pred_region
      _
    $region69: #{tpu_custom_call.1} parent=1 // pred_fallthru
      _
    // Predicated region
    $region70: #{tpu_custom_call.1} parent=1 // pred_check
      _
    $region71: #{tpu_custom_call.1} parent=1 // pred_check_branch
      %208 = sbr.rel (0) target = $region73
    $region72: #{tpu_custom_call.1} parent=1 // pred_region
      _
    $region73: #{tpu_custom_call.1} parent=1 // pred_fallthru
      _
    // Predicated region
    $region74: #{tpu_custom_call.1} parent=1 // pred_check
      _
    $region75: #{tpu_custom_call.1} parent=1 // pred_check_branch
      %210 = sbr.rel (0) target = $region77
    $region76: #{tpu_custom_call.1} parent=1 // pred_region
      _
    $region77: #{tpu_custom_call.1} parent=1 // pred_fallthru
      _
    // Predicated region
    $region78: #{tpu_custom_call.1} parent=1 // pred_check
      _
    $region79: #{tpu_custom_call.1} parent=1 // pred_check_branch
      %212 = sbr.rel (0) target = $region81
    $region80: #{tpu_custom_call.1} parent=1 // pred_region
      _
    $region81: #{tpu_custom_call.1} parent=1 // pred_fallthru
      _
    // Predicated region
    $region82: #{tpu_custom_call.1} parent=1 // pred_check
      _
    $region83: #{tpu_custom_call.1} parent=1 // pred_check_branch
      %214 = sbr.rel (0) target = $region85
    $region84: #{tpu_custom_call.1} parent=1 // pred_region
      _
    $region85: #{tpu_custom_call.1} parent=1 // pred_fallthru
      _
    // Predicated region
    $region86: #{tpu_custom_call.1} parent=1 // pred_check
      _
    $region87: #{tpu_custom_call.1} parent=1 // pred_check_branch
      %216 = sbr.rel (0) target = $region89
    $region88: #{tpu_custom_call.1} parent=1 // pred_region
      _
    $region89: #{tpu_custom_call.1} parent=1 // pred_fallthru
      _
    // Predicated region
    $region90: #{tpu_custom_call.1} parent=1 // pred_check
      _
    $region91: #{tpu_custom_call.1} parent=1 // pred_check_branch
      %218 = sbr.rel (0) target = $region93
    $region92: #{tpu_custom_call.1} parent=1 // pred_region
      _
    $region93: #{tpu_custom_call.1} parent=1 // pred_fallthru
      _
    // Predicated region
    $region94: #{tpu_custom_call.1} parent=1 // pred_check
      _
    $region95: #{tpu_custom_call.1} parent=1 // pred_check_branch
      %220 = sbr.rel (0) target = $region97
    $region96: #{tpu_custom_call.1} parent=1 // pred_region
      _
    $region97: #{tpu_custom_call.1} parent=1 // pred_fallthru
      _
    // Predicated region
    $region98: #{tpu_custom_call.1} parent=1 // pred_check
      _
    $region99: #{tpu_custom_call.1} parent=1 // pred_check_branch
      %222 = sbr.rel (0) target = $region101
    $region100: #{tpu_custom_call.1} parent=1 // pred_region
      _
    $region101: #{tpu_custom_call.1} parent=1 // pred_fallthru
      _
    // Predicated region
    $region102: #{tpu_custom_call.1} parent=1 // pred_check
      _
    $region103: #{tpu_custom_call.1} parent=1 // pred_check_branch
      %224 = sbr.rel (0) target = $region105
    $region104: #{tpu_custom_call.1} parent=1 // pred_region
      %225 = dma.done [#allocation4], 256
    $region105: #{tpu_custom_call.1} parent=1 // pred_fallthru
      _
    // Predicated region
    $region106: #{tpu_custom_call.1} parent=1 // pred_check
      _
    $region107: #{tpu_custom_call.1} parent=1 // pred_check_branch
      %227 = sbr.rel (0) target = $region109
    $region108: #{tpu_custom_call.1} parent=1 // pred_region
      %228 = dma.done [#allocation7], 16
    $region109: #{tpu_custom_call.1} parent=1 // pred_fallthru
      _
    // Predicated region
    $region110: #{tpu_custom_call.1} parent=1 // pred_check
      _
    $region111: #{tpu_custom_call.1} parent=1 // pred_check_branch
      %230 = sbr.rel (0) target = $region113
    $region112: #{tpu_custom_call.1} parent=1 // pred_region
      %231 = dma.done [#allocation7], 128
    $region113: #{tpu_custom_call.1} parent=1 // pred_fallthru
      _
    // Predicated region
    $region114: #{tpu_custom_call.1} parent=1 // pred_check
      _
    $region115: #{tpu_custom_call.1} parent=1 // pred_check_branch
      %233 = sbr.rel (0) target = $region117
    $region116: #{tpu_custom_call.1} parent=1 // pred_region
      %234 = dma.done [#allocation10], 2048
    $region117: #{tpu_custom_call.1} parent=1 // pred_fallthru
      _
    // Predicated region
    $region118: #{tpu_custom_call.1} parent=1 // pred_check
      _
    $region119: #{tpu_custom_call.1} parent=1 // pred_check_branch
      %236 = sbr.rel (0) target = $region121
    $region120: #{tpu_custom_call.1} parent=1 // pred_region
      %237 = dma.done [#allocation10], 256
    $region121: #{tpu_custom_call.1} parent=1 // pred_fallthru
      _
    // Predicated region
    $region122: #{tpu_custom_call.1} parent=1 // pred_check
      _
    $region123: #{tpu_custom_call.1} parent=1 // pred_check_branch
      %239 = sbr.rel (0) target = $region125
    $region124: #{tpu_custom_call.1} parent=1 // pred_region
      %240 = dma.done [#allocation13], 128
    $region125: #{tpu_custom_call.1} parent=1 // pred_fallthru
      _
    // Predicated region
    $region126: #{tpu_custom_call.1} parent=1 // pred_check
      _
    $region127: #{tpu_custom_call.1} parent=1 // pred_check_branch
      %242 = sbr.rel (0) target = $region129
    $region128: #{tpu_custom_call.1} parent=1 // pred_region
      %243 = dma.done [#allocation13], 16
    $region129: #{tpu_custom_call.1} parent=1 // pred_fallthru
      _
    // Predicated region
    $region130: #{tpu_custom_call.1} parent=1 // pred_check
      _
    $region131: #{tpu_custom_call.1} parent=1 // pred_check_branch
      %245 = sbr.rel (0) target = $region133
    $region132: #{tpu_custom_call.1} parent=1 // pred_region
      %246 = dma.done [#allocation16], 4096
    $region133: #{tpu_custom_call.1} parent=1 // pred_fallthru
      _
    // Predicated region
    $region134: #{tpu_custom_call.1} parent=1 // pred_check
      _
    $region135: #{tpu_custom_call.1} parent=1 // pred_check_branch
      %248 = sbr.rel (0) target = $region137
    $region136: #{tpu_custom_call.1} parent=1 // pred_region
      %249 = dma.done [#allocation16], 8192
    $region137: #{tpu_custom_call.1} parent=1 // pred_fallthru
      _
    // Predicated region
    $region138: #{tpu_custom_call.1} parent=1 // pred_check
      _
    $region139: #{tpu_custom_call.1} parent=1 // pred_check_branch
      %251 = sbr.rel (0) target = $region141
    $region140: #{tpu_custom_call.1} parent=1 // pred_region
      %252 = dma.done [#allocation19], 32
    $region141: #{tpu_custom_call.1} parent=1 // pred_fallthru
      _
    // Predicated region
    $region142: #{tpu_custom_call.1} parent=1 // pred_check
      _
    $region143: #{tpu_custom_call.1} parent=1 // pred_check_branch
      %254 = sbr.rel (0) target = $region145
    $region144: #{tpu_custom_call.1} parent=1 // pred_region
      %255 = dma.done [#allocation19], 64
    $region145: #{tpu_custom_call.1} parent=1 // pred_fallthru
      _
    // Predicated region
    $region146: #{tpu_custom_call.1} parent=1 // pred_check
      _
    $region147: #{tpu_custom_call.1} parent=1 // pred_check_branch
      %257 = sbr.rel (0) target = $region149
    $region148: #{tpu_custom_call.1} parent=1 // pred_region
      %258 = dma.done [#allocation22], 64
    $region149: #{tpu_custom_call.1} parent=1 // pred_fallthru
      _
    // Predicated region
    $region150: #{tpu_custom_call.1} parent=1 // pred_check
      _
    $region151: #{tpu_custom_call.1} parent=1 // pred_check_branch
      %260 = sbr.rel (0) target = $region153
    $region152: #{tpu_custom_call.1} parent=1 // pred_region
      %261 = dma.done [#allocation22], 8192
    $region153: #{tpu_custom_call.1} parent=1 // pred_fallthru
      _
    // Predicated region
    $region154: #{tpu_custom_call.1} parent=1 // pred_check
      _
    $region155: #{tpu_custom_call.1} parent=1 // pred_check_branch
      %263 = sbr.rel (0) target = $region157
    $region156: #{tpu_custom_call.1} parent=1 // pred_region
      %264 = dma.done [#allocation25], 64
    $region157: #{tpu_custom_call.1} parent=1 // pred_fallthru
      _
    %v265 = vld [vmem:[#allocation3] sm:$0xff]
    %v266 = vld [vmem:[#allocation3 + $0x8] sm:$0xff]
    %v267 = vld [vmem:[#allocation11] sm:$0xff]
    %v268 = vld [vmem:[#allocation11 + $0x8] sm:$0xff]
    %v269 = vld [vmem:[#allocation8] sm:$0xff]
    %v270 = vld [vmem:[%s4] sm:$0xff]
    %v271 = vld [vmem:[%s4 + $0x8] sm:$0xff]
    %v272 = vld [vmem:[%s4 + $0x10] sm:$0xff]
    %v273 = vld [vmem:[%s4 + $0x18] sm:$0xff]
    %v274 = vld [vmem:[%s4 + $0x20] sm:$0xff]
    %v275 = vld [vmem:[%s4 + $0x28] sm:$0xff]
    %v276 = vld [vmem:[%s4 + $0x30] sm:$0xff]
    %v277 = vld [vmem:[%s4 + $0x38] sm:$0xff]
    %v278 = vld [vmem:[%s4 + $0x40] sm:$0xff]
    %v279 = vld [vmem:[%s4 + $0x48] sm:$0xff]
    %v280 = vld [vmem:[%s4 + $0x50] sm:$0xff]
    %v281 = vld [vmem:[%s4 + $0x58] sm:$0xff]
    %v282 = vld [vmem:[%s4 + $0x60] sm:$0xff]
    %v283 = vld [vmem:[%s4 + $0x68] sm:$0xff]
    %v284 = vld [vmem:[%s4 + $0x70] sm:$0xff]
    %v285 = vld [vmem:[%s4 + $0x78] sm:$0xff]
    %v286 = vld [vmem:[#allocation9] sm:$0xff]
    %v287 = vld [vmem:[#allocation9 + $0x8] sm:$0xff]
    %v288 = vld [vmem:[#allocation9 + $0x10] sm:$0xff]
    %v289 = vld [vmem:[#allocation9 + $0x18] sm:$0xff]
    %v290 = vld [vmem:[#allocation9 + $0x20] sm:$0xff]
    %v291 = vld [vmem:[#allocation9 + $0x28] sm:$0xff]
    %v292 = vld [vmem:[#allocation9 + $0x30] sm:$0xff]
    %v293 = vld [vmem:[#allocation9 + $0x38] sm:$0xff]
    %v294 = vld [vmem:[#allocation9 + $0x40] sm:$0xff]
    %v295 = vld [vmem:[#allocation9 + $0x48] sm:$0xff]
    %v296 = vld [vmem:[#allocation9 + $0x50] sm:$0xff]
    %v297 = vld [vmem:[#allocation9 + $0x58] sm:$0xff]
    %v298 = vld [vmem:[#allocation9 + $0x60] sm:$0xff]
    %v299 = vld [vmem:[#allocation9 + $0x68] sm:$0xff]
    %v300 = vld [vmem:[#allocation9 + $0x70] sm:$0xff]
    %v301 = vld [vmem:[#allocation9 + $0x78] sm:$0xff]
    %v302 = vld [vmem:[%s0] sm:$0xff]
    %v303 = vld [vmem:[%s0 + $0x8] sm:$0xff]
    %v304 = vld [vmem:[#allocation12] sm:$0xff]
    %v305 = vld [vmem:[#allocation14] sm:$0x1]
    %v307 = vlaneseq
    %v308 = vshrl.u32 %v307, 7
    %v309 = vsub.s32 0, %v308
    %v310 = vrot.slane %v305, %v309
    %vm312 = vcmask 64512
    %v314 = vsel %vm312, %v302, 0
    %v317 = vsel %vm312, %v303, 0
    %319 = vmatprep.subr.mxu0 0.0
    %320 = vmatpush1.msra.mxu0 %v304
    %321 = vmatprep.subr.mxu0 0.0
    %322 = vmatpush1.msra.mxu0 0.0
    %323 = vmatprep.subr.mxu0 0.0
    %324 = vmatpush1.msra.mxu0 0.0
    %325 = vmatprep.subr.mxu0 0.0
    %326 = vmatpush1.msra.mxu0 0.0
    %327 = vmatprep.subr.mxu0 0.0
    %328 = vmatpush1.msra.mxu0 0.0
    %329 = vmatprep.subr.mxu0 0.0
    %330 = vmatpush1.msra.mxu0 0.0
    %331 = vmatprep.subr.mxu0 0.0
    %332 = vmatpush1.msra.mxu0 0.0
    %333 = vmatprep.subr.mxu0 0.0
    %334 = vmatpush1.msra.mxu0 0.0
    %335 = vmatprep.subr.mxu0 0.0
    %336 = vmatpush1.msra.mxu0 0.0
    %337 = vmatprep.subr.mxu0 0.0
    %338 = vmatpush1.msra.mxu0 0.0
    %339 = vmatprep.subr.mxu0 0.0
    %340 = vmatpush1.msra.mxu0 0.0
    %341 = vmatprep.subr.mxu0 0.0
    %342 = vmatpush1.msra.mxu0 0.0
    %343 = vmatprep.subr.mxu0 0.0
    %344 = vmatpush1.msra.mxu0 0.0
    %345 = vmatprep.subr.mxu0 0.0
    %346 = vmatpush1.msra.mxu0 0.0
    %347 = vmatprep.subr.mxu0 0.0
    %348 = vmatpush1.msra.mxu0 0.0
    %349 = vmatprep.subr.mxu0 0.0
    %350 = vmatpush1.msra.mxu0 0.0
    %351 = vmatprep.subr.mxu0 0.0
    %352 = vmatpush1.msra.mxu0 0.0
    %353 = vmatprep.subr.mxu0 0.0
    %354 = vmatpush1.msra.mxu0 0.0
    %355 = vmatprep.subr.mxu0 0.0
    %356 = vmatpush1.msra.mxu0 0.0
    %357 = vmatprep.subr.mxu0 0.0
    %358 = vmatpush1.msra.mxu0 0.0
    %359 = vmatprep.subr.mxu0 0.0
    %360 = vmatpush1.msra.mxu0 0.0
    %361 = vmatprep.subr.mxu0 0.0
    %362 = vmatpush1.msra.mxu0 0.0
    %363 = vmatprep.subr.mxu0 0.0
    %364 = vmatpush1.msra.mxu0 0.0
    %365 = vmatprep.subr.mxu0 0.0
    %366 = vmatpush1.msra.mxu0 0.0
    %367 = vmatprep.subr.mxu0 0.0
    %368 = vmatpush1.msra.mxu0 0.0
    %369 = vmatprep.subr.mxu0 0.0
    %370 = vmatpush1.msra.mxu0 0.0
    %371 = vmatprep.subr.mxu0 0.0
    %372 = vmatpush1.msra.mxu0 0.0
    %373 = vmatprep.subr.mxu0 0.0
    %374 = vmatpush1.msra.mxu0 0.0
    %375 = vmatprep.subr.mxu0 0.0
    %376 = vmatpush1.msra.mxu0 0.0
    %377 = vmatprep.subr.mxu0 0.0
    %378 = vmatpush1.msra.mxu0 0.0
    %379 = vmatprep.subr.mxu0 0.0
    %380 = vmatpush1.msra.mxu0 0.0
    %381 = vmatprep.subr.mxu0 0.0
    %382 = vmatpush1.msra.mxu0 0.0
    %383 = vmatprep.mubr.f32.mxu0 0.0
    %384 = vmatmul.mubr.f32.gmra.mrb[0].mxu0 %v314
    %v385 = vpop.f32.mrb[0].mxu0
    %v386 = vadd.f32 %v310, %v385
    %v387 = vpop.f32.mrb[0].mxu0
    %388 = vmatprep.mubr.f32.mxu0 0.0
    %389 = vmatmul.mubr.f32.gmra.mrb[0].mxu0 %v317
    %v390 = vpop.f32.mrb[0].mxu0
    %v391 = vadd.f32 %v310, %v390
    %v392 = vpop.f32.mrb[0].mxu0
    %393 = vdwg.mxu0
    %v394 = vld [vmem:[#allocation15] sm:$0xff]
    %v395 = vld [vmem:[#allocation15 + $0x8] sm:$0xff]
    %v396 = vld [vmem:[#allocation15 + $0x10] sm:$0xff]
    %v397 = vld [vmem:[#allocation15 + $0x18] sm:$0xff]
    %v398 = vld [vmem:[#allocation15 + $0x20] sm:$0xff]
    %v399 = vld [vmem:[#allocation15 + $0x28] sm:$0xff]
    %v400 = vld [vmem:[#allocation15 + $0x30] sm:$0xff]
    %v401 = vld [vmem:[#allocation15 + $0x38] sm:$0xff]
    %v402 = vld [vmem:[#allocation15 + $0x40] sm:$0xff]
    %v403 = vld [vmem:[#allocation15 + $0x48] sm:$0xff]
    %v404 = vld [vmem:[#allocation15 + $0x50] sm:$0xff]
    %v405 = vld [vmem:[#allocation15 + $0x58] sm:$0xff]
    %v406 = vld [vmem:[#allocation15 + $0x60] sm:$0xff]
    %v407 = vld [vmem:[#allocation15 + $0x68] sm:$0xff]
    %v408 = vld [vmem:[#allocation15 + $0x70] sm:$0xff]
    %v409 = vld [vmem:[#allocation15 + $0x78] sm:$0xff]
    %410 = vmatprep.subr.mxu0 0.0
    %411 = vmatpush1.msra.mxu0 %v394
    %412 = vmatprep.subr.mxu0 0.0
    %413 = vmatpush1.msra.mxu0 %v395
    %414 = vmatprep.subr.mxu0 0.0
    %415 = vmatpush1.msra.mxu0 %v396
    %416 = vmatprep.subr.mxu0 0.0
    %417 = vmatpush1.msra.mxu0 %v397
    %418 = vmatprep.subr.mxu0 0.0
    %419 = vmatpush1.msra.mxu0 %v398
    %420 = vmatprep.subr.mxu0 0.0
    %421 = vmatpush1.msra.mxu0 %v399
    %422 = vmatprep.subr.mxu0 0.0
    %423 = vmatpush1.msra.mxu0 %v400
    %424 = vmatprep.subr.mxu0 0.0
    %425 = vmatpush1.msra.mxu0 %v401
    %426 = vmatprep.subr.mxu0 0.0
    %427 = vmatpush1.msra.mxu0 %v402
    %428 = vmatprep.subr.mxu0 0.0
    %429 = vmatpush1.msra.mxu0 %v403
    %430 = vmatprep.subr.mxu0 0.0
    %431 = vmatpush1.msra.mxu0 %v404
    %432 = vmatprep.subr.mxu0 0.0
    %433 = vmatpush1.msra.mxu0 %v405
    %434 = vmatprep.subr.mxu0 0.0
    %435 = vmatpush1.msra.mxu0 %v406
    %436 = vmatprep.subr.mxu0 0.0
    %437 = vmatpush1.msra.mxu0 %v407
    %438 = vmatprep.subr.mxu0 0.0
    %439 = vmatpush1.msra.mxu0 %v408
    %440 = vmatprep.subr.mxu0 0.0
    %441 = vmatpush1.msra.mxu0 %v409
    %442 = vmatprep.subr.mxu0 0.0
    %443 = vmatpush1.msra.mxu0 0.0
    %444 = vmatprep.subr.mxu0 0.0
    %445 = vmatpush1.msra.mxu0 0.0
    %446 = vmatprep.subr.mxu0 0.0
    %447 = vmatpush1.msra.mxu0 0.0
    %448 = vmatprep.subr.mxu0 0.0
    %449 = vmatpush1.msra.mxu0 0.0
    %450 = vmatprep.subr.mxu0 0.0
    %451 = vmatpush1.msra.mxu0 0.0
    %452 = vmatprep.subr.mxu0 0.0
    %453 = vmatpush1.msra.mxu0 0.0
    %454 = vmatprep.subr.mxu0 0.0
    %455 = vmatpush1.msra.mxu0 0.0
    %456 = vmatprep.subr.mxu0 0.0
    %457 = vmatpush1.msra.mxu0 0.0
    %458 = vmatprep.subr.mxu0 0.0
    %459 = vmatpush1.msra.mxu0 0.0
    %460 = vmatprep.subr.mxu0 0.0
    %461 = vmatpush1.msra.mxu0 0.0
    %462 = vmatprep.subr.mxu0 0.0
    %463 = vmatpush1.msra.mxu0 0.0
    %464 = vmatprep.subr.mxu0 0.0
    %465 = vmatpush1.msra.mxu0 0.0
    %466 = vmatprep.subr.mxu0 0.0
    %467 = vmatpush1.msra.mxu0 0.0
    %468 = vmatprep.subr.mxu0 0.0
    %469 = vmatpush1.msra.mxu0 0.0
    %470 = vmatprep.subr.mxu0 0.0
    %471 = vmatpush1.msra.mxu0 0.0
    %472 = vmatprep.subr.mxu0 0.0
    %473 = vmatpush1.msra.mxu0 0.0
    %474 = vmatprep.mubr.f32.mxu0 0.0
    %475 = vmatmul.mubr.f32.gmra.mrb[0].mxu0 %v386
    %v476 = vpop.f32.mrb[0].mxu0
    %v477 = vadd.f32 0.0, %v476
    %v478 = vpop.f32.mrb[0].mxu0
    %479 = vmatprep.mubr.f32.mxu0 0.0
    %480 = vmatmul.mubr.f32.gmra.mrb[0].mxu0 %v391
    %v481 = vpop.f32.mrb[0].mxu0
    %v482 = vadd.f32 0.0, %v481
    %v483 = vpop.f32.mrb[0].mxu0
    %484 = vdwg.mxu0
    %v485 = vld [vmem:[#allocation17] sm:$0xff]
    %v486 = vld [vmem:[#allocation17 + $0x8] sm:$0xff]
    %v487 = vld [vmem:[#allocation17 + $0x10] sm:$0xff]
    %v488 = vld [vmem:[#allocation17 + $0x18] sm:$0xff]
    %v489 = vld [vmem:[#allocation17 + $0x20] sm:$0xff]
    %v490 = vld [vmem:[#allocation17 + $0x28] sm:$0xff]
    %v491 = vld [vmem:[#allocation17 + $0x30] sm:$0xff]
    %v492 = vld [vmem:[#allocation17 + $0x38] sm:$0xff]
    %v493 = vld [vmem:[#allocation17 + $0x40] sm:$0xff]
    %v494 = vld [vmem:[#allocation17 + $0x48] sm:$0xff]
    %v495 = vld [vmem:[#allocation17 + $0x50] sm:$0xff]
    %v496 = vld [vmem:[#allocation17 + $0x58] sm:$0xff]
    %v497 = vld [vmem:[#allocation17 + $0x60] sm:$0xff]
    %v498 = vld [vmem:[#allocation17 + $0x68] sm:$0xff]
    %v499 = vld [vmem:[#allocation17 + $0x70] sm:$0xff]
    %v500 = vld [vmem:[#allocation17 + $0x78] sm:$0xff]
    %v501 = vld [vmem:[#allocation17 + $0x80] sm:$0xff]
    %v502 = vld [vmem:[#allocation17 + $0x88] sm:$0xff]
    %v503 = vld [vmem:[#allocation17 + $0x90] sm:$0xff]
    %v504 = vld [vmem:[#allocation17 + $0x98] sm:$0xff]
    %v505 = vld [vmem:[#allocation17 + $0xa0] sm:$0xff]
    %v506 = vld [vmem:[#allocation17 + $0xa8] sm:$0xff]
    %v507 = vld [vmem:[#allocation17 + $0xb0] sm:$0xff]
    %v508 = vld [vmem:[#allocation17 + $0xb8] sm:$0xff]
    %v509 = vld [vmem:[#allocation17 + $0xc0] sm:$0xff]
    %v510 = vld [vmem:[#allocation17 + $0xc8] sm:$0xff]
    %v511 = vld [vmem:[#allocation17 + $0xd0] sm:$0xff]
    %v512 = vld [vmem:[#allocation17 + $0xd8] sm:$0xff]
    %v513 = vld [vmem:[#allocation17 + $0xe0] sm:$0xff]
    %v514 = vld [vmem:[#allocation17 + $0xe8] sm:$0xff]
    %v515 = vld [vmem:[#allocation17 + $0xf0] sm:$0xff]
    %v516 = vld [vmem:[#allocation17 + $0xf8] sm:$0xff]
    %517 = vmatprep.subr.mxu0 %v486
    %518 = vmatpush1.msra.mxu0 %v485
    %519 = vmatprep.subr.mxu0 %v488
    %520 = vmatpush1.msra.mxu0 %v487
    %521 = vmatprep.subr.mxu0 %v490
    %522 = vmatpush1.msra.mxu0 %v489
    %523 = vmatprep.subr.mxu0 %v492
    %524 = vmatpush1.msra.mxu0 %v491
    %525 = vmatprep.subr.mxu0 %v494
    %526 = vmatpush1.msra.mxu0 %v493
    %527 = vmatprep.subr.mxu0 %v496
    %528 = vmatpush1.msra.mxu0 %v495
    %529 = vmatprep.subr.mxu0 %v498
    %530 = vmatpush1.msra.mxu0 %v497
    %531 = vmatprep.subr.mxu0 %v500
    %532 = vmatpush1.msra.mxu0 %v499
    %533 = vmatprep.subr.mxu0 %v502
    %534 = vmatpush1.msra.mxu0 %v501
    %535 = vmatprep.subr.mxu0 %v504
    %536 = vmatpush1.msra.mxu0 %v503
    %537 = vmatprep.subr.mxu0 %v506
    %538 = vmatpush1.msra.mxu0 %v505
    %539 = vmatprep.subr.mxu0 %v508
    %540 = vmatpush1.msra.mxu0 %v507
    %541 = vmatprep.subr.mxu0 %v510
    %542 = vmatpush1.msra.mxu0 %v509
    %543 = vmatprep.subr.mxu0 %v512
    %544 = vmatpush1.msra.mxu0 %v511
    %545 = vmatprep.subr.mxu0 %v514
    %546 = vmatpush1.msra.mxu0 %v513
    %547 = vmatprep.subr.mxu0 %v516
    %548 = vmatpush1.msra.mxu0 %v515
    %549 = vmatprep.subr.mxu0 0.0
    %550 = vmatpush1.msra.mxu0 0.0
    %551 = vmatprep.subr.mxu0 0.0
    %552 = vmatpush1.msra.mxu0 0.0
    %553 = vmatprep.subr.mxu0 0.0
    %554 = vmatpush1.msra.mxu0 0.0
    %555 = vmatprep.subr.mxu0 0.0
    %556 = vmatpush1.msra.mxu0 0.0
    %557 = vmatprep.subr.mxu0 0.0
    %558 = vmatpush1.msra.mxu0 0.0
    %559 = vmatprep.subr.mxu0 0.0
    %560 = vmatpush1.msra.mxu0 0.0
    %561 = vmatprep.subr.mxu0 0.0
    %562 = vmatpush1.msra.mxu0 0.0
    %563 = vmatprep.subr.mxu0 0.0
    %564 = vmatpush1.msra.mxu0 0.0
    %565 = vmatprep.subr.mxu0 0.0
    %566 = vmatpush1.msra.mxu0 0.0
    %567 = vmatprep.subr.mxu0 0.0
    %568 = vmatpush1.msra.mxu0 0.0
    %569 = vmatprep.subr.mxu0 0.0
    %570 = vmatpush1.msra.mxu0 0.0
    %571 = vmatprep.subr.mxu0 0.0
    %572 = vmatpush1.msra.mxu0 0.0
    %573 = vmatprep.subr.mxu0 0.0
    %574 = vmatpush1.msra.mxu0 0.0
    %575 = vmatprep.subr.mxu0 0.0
    %576 = vmatpush1.msra.mxu0 0.0
    %577 = vmatprep.subr.mxu0 0.0
    %578 = vmatpush1.msra.mxu0 0.0
    %579 = vmatprep.subr.mxu0 0.0
    %580 = vmatpush1.msra.mxu0 0.0
    %581 = vmatprep.mubr.f32.mxu0 0.0
    %582 = vmatmul.mubr.f32.gmra.mrb[0].mxu0 %v477
    %v583 = vpop.f32.mrb[0].mxu0
    %v584 = vadd.f32 0.0, %v583
    %v585 = vpop.f32.mrb[0].mxu0
    %v586 = vadd.f32 0.0, %v585
    %587 = vmatprep.mubr.f32.mxu0 0.0
    %588 = vmatmul.mubr.f32.gmra.mrb[0].mxu0 %v482
    %v589 = vpop.f32.mrb[0].mxu0
    %v590 = vadd.f32 0.0, %v589
    %v591 = vpop.f32.mrb[0].mxu0
    %v592 = vadd.f32 0.0, %v591
    %593 = vdwg.mxu0
    %v594 = vmul.f32 %v584, %v267
    %v595 = vmul.f32 %v590, %v268
    %v596 = vadd.f32 %v594, %v595
    %v597 = vrot.slane %v596, 4
    %v598 = vadd.f32 %v596, %v597
    %v599 = vrot.slane %v598, 2
    %v600 = vadd.f32 %v598, %v599
    %v601 = vrot.slane %v600, 1
    %v602 = vadd.f32 %v600, %v601
    %v603 = vadd.f32 %v586, %v602
    %v604 = vadd.f32 %v592, %v602
    %v605 = vmul.f32 %v603, 0.2
    %v606 = vmul.f32 %v604, 0.2
    %v607 = vmax.f32 %v603, %v605
    %v608 = vmax.f32 %v604, %v606
    %v609 = vadd.f32 %v607, %v265
    %v610 = vadd.f32 %v608, %v266
    %611 = vmax.xlane.f32.xlu0 %v609
    %v612 = vpop.xlane.xlu0 %611
    %613 = vmax.xlane.f32.xlu0 %v610
    %v614 = vpop.xlane.xlu0 %613
    %v615 = vsub.f32 %v609, %v612
    %v616 = vsub.f32 %v610, %v614
    %v617 = vmul.f32 %v615, 1.442695
    %v618 = vpow.pop %v617
    %v619 = vmul.f32 %v616, 1.442695
    %v620 = vpow.pop %v619
    %621 = vmatprep.subr.mxu0 0.0
    %622 = vmatpush1.msra.mxu0 %v270
    %623 = vmatprep.subr.mxu0 0.0
    %624 = vmatpush1.msra.mxu0 %v271
    %625 = vmatprep.subr.mxu0 0.0
    %626 = vmatpush1.msra.mxu0 %v272
    %627 = vmatprep.subr.mxu0 0.0
    %628 = vmatpush1.msra.mxu0 %v273
    %629 = vmatprep.subr.mxu0 0.0
    %630 = vmatpush1.msra.mxu0 %v274
    %631 = vmatprep.subr.mxu0 0.0
    %632 = vmatpush1.msra.mxu0 %v275
    %633 = vmatprep.subr.mxu0 0.0
    %634 = vmatpush1.msra.mxu0 %v276
    %635 = vmatprep.subr.mxu0 0.0
    %636 = vmatpush1.msra.mxu0 %v277
    %637 = vmatprep.subr.mxu0 0.0
    %638 = vmatpush1.msra.mxu0 %v278
    %639 = vmatprep.subr.mxu0 0.0
    %640 = vmatpush1.msra.mxu0 %v279
    %641 = vmatprep.subr.mxu0 0.0
    %642 = vmatpush1.msra.mxu0 %v280
    %643 = vmatprep.subr.mxu0 0.0
    %644 = vmatpush1.msra.mxu0 %v281
    %645 = vmatprep.subr.mxu0 0.0
    %646 = vmatpush1.msra.mxu0 %v282
    %647 = vmatprep.subr.mxu0 0.0
    %648 = vmatpush1.msra.mxu0 %v283
    %649 = vmatprep.subr.mxu0 0.0
    %650 = vmatpush1.msra.mxu0 %v284
    %651 = vmatprep.subr.mxu0 0.0
    %652 = vmatpush1.msra.mxu0 %v285
    %653 = vmatprep.subr.mxu0 0.0
    %654 = vmatpush1.msra.mxu0 0.0
    %655 = vmatprep.subr.mxu0 0.0
    %656 = vmatpush1.msra.mxu0 0.0
    %657 = vmatprep.subr.mxu0 0.0
    %658 = vmatpush1.msra.mxu0 0.0
    %659 = vmatprep.subr.mxu0 0.0
    %660 = vmatpush1.msra.mxu0 0.0
    %661 = vmatprep.subr.mxu0 0.0
    %662 = vmatpush1.msra.mxu0 0.0
    %663 = vmatprep.subr.mxu0 0.0
    %664 = vmatpush1.msra.mxu0 0.0
    %665 = vmatprep.subr.mxu0 0.0
    %666 = vmatpush1.msra.mxu0 0.0
    %667 = vmatprep.subr.mxu0 0.0
    %668 = vmatpush1.msra.mxu0 0.0
    %669 = vmatprep.subr.mxu0 0.0
    %670 = vmatpush1.msra.mxu0 0.0
    %671 = vmatprep.subr.mxu0 0.0
    %672 = vmatpush1.msra.mxu0 0.0
    %673 = vmatprep.subr.mxu0 0.0
    %674 = vmatpush1.msra.mxu0 0.0
    %675 = vmatprep.subr.mxu0 0.0
    %676 = vmatpush1.msra.mxu0 0.0
    %677 = vmatprep.subr.mxu0 0.0
    %678 = vmatpush1.msra.mxu0 0.0
    %679 = vmatprep.subr.mxu0 0.0
    %680 = vmatpush1.msra.mxu0 0.0
    %681 = vmatprep.subr.mxu0 0.0
    %682 = vmatpush1.msra.mxu0 0.0
    %683 = vmatprep.subr.mxu0 0.0
    %684 = vmatpush1.msra.mxu0 0.0
    %685 = vmatprep.mubr.f32.mxu0 0.0
    %686 = vmatmul.mubr.f32.gmra.mrb[0].mxu0 %v618
    %v687 = vpop.f32.mrb[0].mxu0
    %v688 = vadd.f32 0.0, %v687
    %v689 = vpop.f32.mrb[0].mxu0
    %690 = vmatprep.mubr.f32.mxu0 0.0
    %691 = vmatmul.mubr.f32.gmra.mrb[0].mxu0 %v620
    %v692 = vpop.f32.mrb[0].mxu0
    %v693 = vadd.f32 0.0, %v692
    %v694 = vpop.f32.mrb[0].mxu0
    %695 = vdwg.mxu0
    %v696 = vrcp.pop %v688
    %v697 = vrcp.pop %v693
    %v699 = vsel %vm312, %v696, 0
    %v702 = vsel %vm312, %v697, 0
    %704 = vmatprep.subr.mxu0 0.0
    %705 = vmatpush1.msra.mxu0 %v269
    %706 = vmatprep.subr.mxu0 0.0
    %707 = vmatpush1.msra.mxu0 0.0
    %708 = vmatprep.subr.mxu0 0.0
    %709 = vmatpush1.msra.mxu0 0.0
    %710 = vmatprep.subr.mxu0 0.0
    %711 = vmatpush1.msra.mxu0 0.0
    %712 = vmatprep.subr.mxu0 0.0
    %713 = vmatpush1.msra.mxu0 0.0
    %714 = vmatprep.subr.mxu0 0.0
    %715 = vmatpush1.msra.mxu0 0.0
    %716 = vmatprep.subr.mxu0 0.0
    %717 = vmatpush1.msra.mxu0 0.0
    %718 = vmatprep.subr.mxu0 0.0
    %719 = vmatpush1.msra.mxu0 0.0
    %720 = vmatprep.subr.mxu0 0.0
    %721 = vmatpush1.msra.mxu0 0.0
    %722 = vmatprep.subr.mxu0 0.0
    %723 = vmatpush1.msra.mxu0 0.0
    %724 = vmatprep.subr.mxu0 0.0
    %725 = vmatpush1.msra.mxu0 0.0
    %726 = vmatprep.subr.mxu0 0.0
    %727 = vmatpush1.msra.mxu0 0.0
    %728 = vmatprep.subr.mxu0 0.0
    %729 = vmatpush1.msra.mxu0 0.0
    %730 = vmatprep.subr.mxu0 0.0
    %731 = vmatpush1.msra.mxu0 0.0
    %732 = vmatprep.subr.mxu0 0.0
    %733 = vmatpush1.msra.mxu0 0.0
    %734 = vmatprep.subr.mxu0 0.0
    %735 = vmatpush1.msra.mxu0 0.0
    %736 = vmatprep.subr.mxu0 0.0
    %737 = vmatpush1.msra.mxu0 0.0
    %738 = vmatprep.subr.mxu0 0.0
    %739 = vmatpush1.msra.mxu0 0.0
    %740 = vmatprep.subr.mxu0 0.0
    %741 = vmatpush1.msra.mxu0 0.0
    %742 = vmatprep.subr.mxu0 0.0
    %743 = vmatpush1.msra.mxu0 0.0
    %744 = vmatprep.subr.mxu0 0.0
    %745 = vmatpush1.msra.mxu0 0.0
    %746 = vmatprep.subr.mxu0 0.0
    %747 = vmatpush1.msra.mxu0 0.0
    %748 = vmatprep.subr.mxu0 0.0
    %749 = vmatpush1.msra.mxu0 0.0
    %750 = vmatprep.subr.mxu0 0.0
    %751 = vmatpush1.msra.mxu0 0.0
    %752 = vmatprep.subr.mxu0 0.0
    %753 = vmatpush1.msra.mxu0 0.0
    %754 = vmatprep.subr.mxu0 0.0
    %755 = vmatpush1.msra.mxu0 0.0
    %756 = vmatprep.subr.mxu0 0.0
    %757 = vmatpush1.msra.mxu0 0.0
    %758 = vmatprep.subr.mxu0 0.0
    %759 = vmatpush1.msra.mxu0 0.0
    %760 = vmatprep.subr.mxu0 0.0
    %761 = vmatpush1.msra.mxu0 0.0
    %762 = vmatprep.subr.mxu0 0.0
    %763 = vmatpush1.msra.mxu0 0.0
    %764 = vmatprep.subr.mxu0 0.0
    %765 = vmatpush1.msra.mxu0 0.0
    %766 = vmatprep.subr.mxu0 0.0
    %767 = vmatpush1.msra.mxu0 0.0
    %768 = vmatprep.mubr.f32.mxu0 0.0
    %769 = vmatmul.mubr.f32.gmra.mrb[0].mxu0 %v699
    %v770 = vpop.f32.mrb[0].mxu0
    %v771 = vadd.f32 0.0, %v770
    %v772 = vpop.f32.mrb[0].mxu0
    %773 = vmatprep.mubr.f32.mxu0 0.0
    %774 = vmatmul.mubr.f32.gmra.mrb[0].mxu0 %v702
    %v775 = vpop.f32.mrb[0].mxu0
    %v776 = vadd.f32 0.0, %v775
    %v777 = vpop.f32.mrb[0].mxu0
    %778 = vdwg.mxu0
    %v779 = vmul.f32 %v618, %v771
    %v780 = vmul.f32 %v620, %v776
    %v781 = vmul.f32 %v477, %v286
    %v782 = vmul.f32 %v482, %v287
    %v783 = vmul.f32 %v477, %v288
    %v784 = vmul.f32 %v482, %v289
    %v785 = vmul.f32 %v477, %v290
    %v786 = vmul.f32 %v482, %v291
    %v787 = vmul.f32 %v477, %v292
    %v788 = vmul.f32 %v482, %v293
    %v789 = vmul.f32 %v477, %v294
    %v790 = vmul.f32 %v482, %v295
    %v791 = vmul.f32 %v477, %v296
    %v792 = vmul.f32 %v482, %v297
    %v793 = vmul.f32 %v477, %v298
    %v794 = vmul.f32 %v482, %v299
    %v795 = vmul.f32 %v477, %v300
    %v796 = vmul.f32 %v482, %v301
    %v797 = vld [vmem:[#allocation18] sm:$0x1]
    %v799 = vlaneseq
    %v800 = vshrl.u32 %v799, 7
    %v801 = vsub.s32 0, %v800
    %v802 = vrot.slane %v797, %v801
    %804 = vmatprep.subr.mxu0 0.0
    %805 = vmatpush1.msra.mxu0 %v781
    %806 = vmatprep.subr.mxu0 0.0
    %807 = vmatpush1.msra.mxu0 %v782
    %808 = vmatprep.subr.mxu0 0.0
    %809 = vmatpush1.msra.mxu0 %v783
    %810 = vmatprep.subr.mxu0 0.0
    %811 = vmatpush1.msra.mxu0 %v784
    %812 = vmatprep.subr.mxu0 0.0
    %813 = vmatpush1.msra.mxu0 %v785
    %814 = vmatprep.subr.mxu0 0.0
    %815 = vmatpush1.msra.mxu0 %v786
    %816 = vmatprep.subr.mxu0 0.0
    %817 = vmatpush1.msra.mxu0 %v787
    %818 = vmatprep.subr.mxu0 0.0
    %819 = vmatpush1.msra.mxu0 %v788
    %820 = vmatprep.subr.mxu0 0.0
    %821 = vmatpush1.msra.mxu0 %v789
    %822 = vmatprep.subr.mxu0 0.0
    %823 = vmatpush1.msra.mxu0 %v790
    %824 = vmatprep.subr.mxu0 0.0
    %825 = vmatpush1.msra.mxu0 %v791
    %826 = vmatprep.subr.mxu0 0.0
    %827 = vmatpush1.msra.mxu0 %v792
    %828 = vmatprep.subr.mxu0 0.0
    %829 = vmatpush1.msra.mxu0 %v793
    %830 = vmatprep.subr.mxu0 0.0
    %831 = vmatpush1.msra.mxu0 %v794
    %832 = vmatprep.subr.mxu0 0.0
    %833 = vmatpush1.msra.mxu0 %v795
    %834 = vmatprep.subr.mxu0 0.0
    %835 = vmatpush1.msra.mxu0 %v796
    %836 = vmatprep.subr.mxu0 0.0
    %837 = vmatpush1.msra.mxu0 0.0
    %838 = vmatprep.subr.mxu0 0.0
    %839 = vmatpush1.msra.mxu0 0.0
    %840 = vmatprep.subr.mxu0 0.0
    %841 = vmatpush1.msra.mxu0 0.0
    %842 = vmatprep.subr.mxu0 0.0
    %843 = vmatpush1.msra.mxu0 0.0
    %844 = vmatprep.subr.mxu0 0.0
    %845 = vmatpush1.msra.mxu0 0.0
    %846 = vmatprep.subr.mxu0 0.0
    %847 = vmatpush1.msra.mxu0 0.0
    %848 = vmatprep.subr.mxu0 0.0
    %849 = vmatpush1.msra.mxu0 0.0
    %850 = vmatprep.subr.mxu0 0.0
    %851 = vmatpush1.msra.mxu0 0.0
    %852 = vmatprep.subr.mxu0 0.0
    %853 = vmatpush1.msra.mxu0 0.0
    %854 = vmatprep.subr.mxu0 0.0
    %855 = vmatpush1.msra.mxu0 0.0
    %856 = vmatprep.subr.mxu0 0.0
    %857 = vmatpush1.msra.mxu0 0.0
    %858 = vmatprep.subr.mxu0 0.0
    %859 = vmatpush1.msra.mxu0 0.0
    %860 = vmatprep.subr.mxu0 0.0
    %861 = vmatpush1.msra.mxu0 0.0
    %862 = vmatprep.subr.mxu0 0.0
    %863 = vmatpush1.msra.mxu0 0.0
    %864 = vmatprep.subr.mxu0 0.0
    %865 = vmatpush1.msra.mxu0 0.0
    %866 = vmatprep.subr.mxu0 0.0
    %867 = vmatpush1.msra.mxu0 0.0
    %868 = vmatprep.mubr.f32.mxu0 0.0
    %869 = vmatmul.mubr.f32.gmra.mrb[0].mxu0 %v779
    %v870 = vpop.f32.mrb[0].mxu0
    %v871 = vadd.f32 %v802, %v870
    %v872 = vpop.f32.mrb[0].mxu0
    %873 = vmatprep.mubr.f32.mxu0 0.0
    %874 = vmatmul.mubr.f32.gmra.mrb[0].mxu0 %v780
    %v875 = vpop.f32.mrb[0].mxu0
    %v876 = vadd.f32 %v802, %v875
    %v877 = vpop.f32.mrb[0].mxu0
    %878 = vdwg.mxu0
    %v879 = vadd.f32 %v386, %v871
    %v880 = vadd.f32 %v391, %v876
    %v881 = vld [vmem:[#allocation20] sm:$0x1]
    %v883 = vlaneseq
    %v884 = vshrl.u32 %v883, 7
    %v885 = vsub.s32 0, %v884
    %v886 = vrot.slane %v881, %v885
    %v888 = vmul.f32 %v879, %v886
    %v889 = vmul.f32 %v880, %v886
    %v890 = vld [vmem:[#allocation21] sm:$0x1]
    %v892 = vlaneseq
    %v893 = vshrl.u32 %v892, 7
    %v894 = vsub.s32 0, %v893
    %v895 = vrot.slane %v890, %v894
    %v897 = vadd.f32 %v888, %v895
    %v898 = vadd.f32 %v889, %v895
    %v899 = vld [vmem:[#allocation23] sm:$0xff]
    %v900 = vld [vmem:[#allocation23 + $0x8] sm:$0xff]
    %v901 = vld [vmem:[#allocation23 + $0x10] sm:$0xff]
    %v902 = vld [vmem:[#allocation23 + $0x18] sm:$0xff]
    %v903 = vld [vmem:[#allocation23 + $0x20] sm:$0xff]
    %v904 = vld [vmem:[#allocation23 + $0x28] sm:$0xff]
    %v905 = vld [vmem:[#allocation23 + $0x30] sm:$0xff]
    %v906 = vld [vmem:[#allocation23 + $0x38] sm:$0xff]
    %v907 = vld [vmem:[#allocation23 + $0x40] sm:$0xff]
    %v908 = vld [vmem:[#allocation23 + $0x48] sm:$0xff]
    %v909 = vld [vmem:[#allocation23 + $0x50] sm:$0xff]
    %v910 = vld [vmem:[#allocation23 + $0x58] sm:$0xff]
    %v911 = vld [vmem:[#allocation23 + $0x60] sm:$0xff]
    %v912 = vld [vmem:[#allocation23 + $0x68] sm:$0xff]
    %v913 = vld [vmem:[#allocation23 + $0x70] sm:$0xff]
    %v914 = vld [vmem:[#allocation23 + $0x78] sm:$0xff]
    %v915 = vld [vmem:[#allocation23 + $0x80] sm:$0xff]
    %v916 = vld [vmem:[#allocation23 + $0x88] sm:$0xff]
    %v917 = vld [vmem:[#allocation23 + $0x90] sm:$0xff]
    %v918 = vld [vmem:[#allocation23 + $0x98] sm:$0xff]
    %v919 = vld [vmem:[#allocation23 + $0xa0] sm:$0xff]
    %v920 = vld [vmem:[#allocation23 + $0xa8] sm:$0xff]
    %v921 = vld [vmem:[#allocation23 + $0xb0] sm:$0xff]
    %v922 = vld [vmem:[#allocation23 + $0xb8] sm:$0xff]
    %v923 = vld [vmem:[#allocation23 + $0xc0] sm:$0xff]
    %v924 = vld [vmem:[#allocation23 + $0xc8] sm:$0xff]
    %v925 = vld [vmem:[#allocation23 + $0xd0] sm:$0xff]
    %v926 = vld [vmem:[#allocation23 + $0xd8] sm:$0xff]
    %v927 = vld [vmem:[#allocation23 + $0xe0] sm:$0xff]
    %v928 = vld [vmem:[#allocation23 + $0xe8] sm:$0xff]
    %v929 = vld [vmem:[#allocation23 + $0xf0] sm:$0xff]
    %v930 = vld [vmem:[#allocation23 + $0xf8] sm:$0xff]
    %v931 = vld [vmem:[#allocation24] sm:$0x3]
    %v933 = vlaneseq
    %v934 = vshrl.u32 %v933, 7
    %v935 = vsub.s32 0, %v934
    %v936 = vrot.slane %v931, %v935
    %v937 = vlaneseq
    %v938 = vshrl.u32 %v937, 7
    %v939 = vsub.s32 1, %v938
    %v940 = vrot.slane %v931, %v939
    %943 = vmatprep.subr.mxu0 %v900
    %944 = vmatpush1.msra.mxu0 %v899
    %945 = vmatprep.subr.mxu0 %v902
    %946 = vmatpush1.msra.mxu0 %v901
    %947 = vmatprep.subr.mxu0 %v904
    %948 = vmatpush1.msra.mxu0 %v903
    %949 = vmatprep.subr.mxu0 %v906
    %950 = vmatpush1.msra.mxu0 %v905
    %951 = vmatprep.subr.mxu0 %v908
    %952 = vmatpush1.msra.mxu0 %v907
    %953 = vmatprep.subr.mxu0 %v910
    %954 = vmatpush1.msra.mxu0 %v909
    %955 = vmatprep.subr.mxu0 %v912
    %956 = vmatpush1.msra.mxu0 %v911
    %957 = vmatprep.subr.mxu0 %v914
    %958 = vmatpush1.msra.mxu0 %v913
    %959 = vmatprep.subr.mxu0 %v916
    %960 = vmatpush1.msra.mxu0 %v915
    %961 = vmatprep.subr.mxu0 %v918
    %962 = vmatpush1.msra.mxu0 %v917
    %963 = vmatprep.subr.mxu0 %v920
    %964 = vmatpush1.msra.mxu0 %v919
    %965 = vmatprep.subr.mxu0 %v922
    %966 = vmatpush1.msra.mxu0 %v921
    %967 = vmatprep.subr.mxu0 %v924
    %968 = vmatpush1.msra.mxu0 %v923
    %969 = vmatprep.subr.mxu0 %v926
    %970 = vmatpush1.msra.mxu0 %v925
    %971 = vmatprep.subr.mxu0 %v928
    %972 = vmatpush1.msra.mxu0 %v927
    %973 = vmatprep.subr.mxu0 %v930
    %974 = vmatpush1.msra.mxu0 %v929
    %975 = vmatprep.subr.mxu0 0.0
    %976 = vmatpush1.msra.mxu0 0.0
    %977 = vmatprep.subr.mxu0 0.0
    %978 = vmatpush1.msra.mxu0 0.0
    %979 = vmatprep.subr.mxu0 0.0
    %980 = vmatpush1.msra.mxu0 0.0
    %981 = vmatprep.subr.mxu0 0.0
    %982 = vmatpush1.msra.mxu0 0.0
    %983 = vmatprep.subr.mxu0 0.0
    %984 = vmatpush1.msra.mxu0 0.0
    %985 = vmatprep.subr.mxu0 0.0
    %986 = vmatpush1.msra.mxu0 0.0
    %987 = vmatprep.subr.mxu0 0.0
    %988 = vmatpush1.msra.mxu0 0.0
    %989 = vmatprep.subr.mxu0 0.0
    %990 = vmatpush1.msra.mxu0 0.0
    %991 = vmatprep.subr.mxu0 0.0
    %992 = vmatpush1.msra.mxu0 0.0
    %993 = vmatprep.subr.mxu0 0.0
    %994 = vmatpush1.msra.mxu0 0.0
    %995 = vmatprep.subr.mxu0 0.0
    %996 = vmatpush1.msra.mxu0 0.0
    %997 = vmatprep.subr.mxu0 0.0
    %998 = vmatpush1.msra.mxu0 0.0
    %999 = vmatprep.subr.mxu0 0.0
    %1000 = vmatpush1.msra.mxu0 0.0
    %1001 = vmatprep.subr.mxu0 0.0
    %1002 = vmatpush1.msra.mxu0 0.0
    %1003 = vmatprep.subr.mxu0 0.0
    %1004 = vmatpush1.msra.mxu0 0.0
    %1005 = vmatprep.subr.mxu0 0.0
    %1006 = vmatpush1.msra.mxu0 0.0
    %1007 = vmatprep.mubr.f32.mxu0 0.0
    %1008 = vmatmul.mubr.f32.gmra.mrb[0].mxu0 %v897
    %v1009 = vpop.f32.mrb[0].mxu0
    %v1010 = vadd.f32 %v936, %v1009
    %v1011 = vpop.f32.mrb[0].mxu0
    %v1012 = vadd.f32 %v940, %v1011
    %1013 = vmatprep.mubr.f32.mxu0 0.0
    %1014 = vmatmul.mubr.f32.gmra.mrb[0].mxu0 %v898
    %v1015 = vpop.f32.mrb[0].mxu0
    %v1016 = vadd.f32 %v936, %v1015
    %v1017 = vpop.f32.mrb[0].mxu0
    %v1018 = vadd.f32 %v940, %v1017
    %1019 = vdwg.mxu0
    %v1020 = vmax.f32 %v1010, 0.0
    %v1021 = vmax.f32 %v1012, 0.0
    %v1022 = vmax.f32 %v1016, 0.0
    %v1023 = vmax.f32 %v1018, 0.0
    %v1024 = vld [vmem:[%s16] sm:$0xff]
    %v1025 = vld [vmem:[%s16 + $0x8] sm:$0xff]
    %v1026 = vld [vmem:[%s16 + $0x10] sm:$0xff]
    %v1027 = vld [vmem:[%s16 + $0x18] sm:$0xff]
    %v1028 = vld [vmem:[%s16 + $0x20] sm:$0xff]
    %v1029 = vld [vmem:[%s16 + $0x28] sm:$0xff]
    %v1030 = vld [vmem:[%s16 + $0x30] sm:$0xff]
    %v1031 = vld [vmem:[%s16 + $0x38] sm:$0xff]
    %v1032 = vld [vmem:[%s16 + $0x40] sm:$0xff]
    %v1033 = vld [vmem:[%s16 + $0x48] sm:$0xff]
    %v1034 = vld [vmem:[%s16 + $0x50] sm:$0xff]
    %v1035 = vld [vmem:[%s16 + $0x58] sm:$0xff]
    %v1036 = vld [vmem:[%s16 + $0x60] sm:$0xff]
    %v1037 = vld [vmem:[%s16 + $0x68] sm:$0xff]
    %v1038 = vld [vmem:[%s16 + $0x70] sm:$0xff]
    %v1039 = vld [vmem:[%s16 + $0x78] sm:$0xff]
    %v1040 = vld [vmem:[%s16 + $0x80] sm:$0xff]
    %v1041 = vld [vmem:[%s16 + $0x88] sm:$0xff]
    %v1042 = vld [vmem:[%s16 + $0x90] sm:$0xff]
    %v1043 = vld [vmem:[%s16 + $0x98] sm:$0xff]
    %v1044 = vld [vmem:[%s16 + $0xa0] sm:$0xff]
    %v1045 = vld [vmem:[%s16 + $0xa8] sm:$0xff]
    %v1046 = vld [vmem:[%s16 + $0xb0] sm:$0xff]
    %v1047 = vld [vmem:[%s16 + $0xb8] sm:$0xff]
    %v1048 = vld [vmem:[%s16 + $0xc0] sm:$0xff]
    %v1049 = vld [vmem:[%s16 + $0xc8] sm:$0xff]
    %v1050 = vld [vmem:[%s16 + $0xd0] sm:$0xff]
    %v1051 = vld [vmem:[%s16 + $0xd8] sm:$0xff]
    %v1052 = vld [vmem:[%s16 + $0xe0] sm:$0xff]
    %v1053 = vld [vmem:[%s16 + $0xe8] sm:$0xff]
    %v1054 = vld [vmem:[%s16 + $0xf0] sm:$0xff]
    %v1055 = vld [vmem:[%s16 + $0xf8] sm:$0xff]
    %v1056 = vld [vmem:[%s17] sm:$0x1]
    %v1058 = vlaneseq
    %v1059 = vshrl.u32 %v1058, 7
    %v1060 = vsub.s32 0, %v1059
    %v1061 = vrot.slane %v1056, %v1060
    %1063 = vmatprep.subr.mxu0 0.0
    %1064 = vmatpush1.msra.mxu0 %v1024
    %1065 = vmatprep.subr.mxu0 0.0
    %1066 = vmatpush1.msra.mxu0 %v1025
    %1067 = vmatprep.subr.mxu0 0.0
    %1068 = vmatpush1.msra.mxu0 %v1026
    %1069 = vmatprep.subr.mxu0 0.0
    %1070 = vmatpush1.msra.mxu0 %v1027
    %1071 = vmatprep.subr.mxu0 0.0
    %1072 = vmatpush1.msra.mxu0 %v1028
    %1073 = vmatprep.subr.mxu0 0.0
    %1074 = vmatpush1.msra.mxu0 %v1029
    %1075 = vmatprep.subr.mxu0 0.0
    %1076 = vmatpush1.msra.mxu0 %v1030
    %1077 = vmatprep.subr.mxu0 0.0
    %1078 = vmatpush1.msra.mxu0 %v1031
    %1079 = vmatprep.subr.mxu0 0.0
    %1080 = vmatpush1.msra.mxu0 %v1032
    %1081 = vmatprep.subr.mxu0 0.0
    %1082 = vmatpush1.msra.mxu0 %v1033
    %1083 = vmatprep.subr.mxu0 0.0
    %1084 = vmatpush1.msra.mxu0 %v1034
    %1085 = vmatprep.subr.mxu0 0.0
    %1086 = vmatpush1.msra.mxu0 %v1035
    %1087 = vmatprep.subr.mxu0 0.0
    %1088 = vmatpush1.msra.mxu0 %v1036
    %1089 = vmatprep.subr.mxu0 0.0
    %1090 = vmatpush1.msra.mxu0 %v1037
    %1091 = vmatprep.subr.mxu0 0.0
    %1092 = vmatpush1.msra.mxu0 %v1038
    %1093 = vmatprep.subr.mxu0 0.0
    %1094 = vmatpush1.msra.mxu0 %v1039
    %1095 = vmatprep.subr.mxu0 0.0
    %1096 = vmatpush1.msra.mxu0 %v1040
    %1097 = vmatprep.subr.mxu0 0.0
    %1098 = vmatpush1.msra.mxu0 %v1041
    %1099 = vmatprep.subr.mxu0 0.0
    %1100 = vmatpush1.msra.mxu0 %v1042
    %1101 = vmatprep.subr.mxu0 0.0
    %1102 = vmatpush1.msra.mxu0 %v1043
    %1103 = vmatprep.subr.mxu0 0.0
    %1104 = vmatpush1.msra.mxu0 %v1044
    %1105 = vmatprep.subr.mxu0 0.0
    %1106 = vmatpush1.msra.mxu0 %v1045
    %1107 = vmatprep.subr.mxu0 0.0
    %1108 = vmatpush1.msra.mxu0 %v1046
    %1109 = vmatprep.subr.mxu0 0.0
    %1110 = vmatpush1.msra.mxu0 %v1047
    %1111 = vmatprep.subr.mxu0 0.0
    %1112 = vmatpush1.msra.mxu0 %v1048
    %1113 = vmatprep.subr.mxu0 0.0
    %1114 = vmatpush1.msra.mxu0 %v1049
    %1115 = vmatprep.subr.mxu0 0.0
    %1116 = vmatpush1.msra.mxu0 %v1050
    %1117 = vmatprep.subr.mxu0 0.0
    %1118 = vmatpush1.msra.mxu0 %v1051
    %1119 = vmatprep.subr.mxu0 0.0
    %1120 = vmatpush1.msra.mxu0 %v1052
    %1121 = vmatprep.subr.mxu0 0.0
    %1122 = vmatpush1.msra.mxu0 %v1053
    %1123 = vmatprep.subr.mxu0 0.0
    %1124 = vmatpush1.msra.mxu0 %v1054
    %1125 = vmatprep.subr.mxu0 0.0
    %1126 = vmatpush1.msra.mxu0 %v1055
    %1127 = vmatprep.mubr.f32.mxu0 %v1021
    %1128 = vmatmul.mubr.f32.gmra.mrb[0].mxu0 %v1020
    %v1129 = vpop.f32.mrb[0].mxu0
    %v1130 = vadd.f32 %v1061, %v1129
    %v1131 = vpop.f32.mrb[0].mxu0
    %1132 = vmatprep.mubr.f32.mxu0 %v1023
    %1133 = vmatmul.mubr.f32.gmra.mrb[0].mxu0 %v1022
    %v1134 = vpop.f32.mrb[0].mxu0
    %v1135 = vadd.f32 %v1061, %v1134
    %v1136 = vpop.f32.mrb[0].mxu0
    %1137 = vdwg.mxu0
    %v1138 = vadd.f32 %v897, %v1130
    %v1139 = vadd.f32 %v898, %v1135
    %s1140 = scalar_lea.vmem [#allocation20], 1
    %v1141 = vld [vmem:[%s1140] sm:$0x1]
    %v1143 = vlaneseq
    %v1144 = vshrl.u32 %v1143, 7
    %v1145 = vsub.s32 0, %v1144
    %v1146 = vrot.slane %v1141, %v1145
    %v1148 = vmul.f32 %v1138, %v1146
    %v1149 = vmul.f32 %v1139, %v1146
    %s1150 = scalar_lea.vmem [#allocation21], 1
    %v1151 = vld [vmem:[%s1150] sm:$0x1]
    %v1153 = vlaneseq
    %v1154 = vshrl.u32 %v1153, 7
    %v1155 = vsub.s32 0, %v1154
    %v1156 = vrot.slane %v1151, %v1155
    %v1158 = vadd.f32 %v1148, %v1156
    %v1159 = vadd.f32 %v1149, %v1156
    %s1160 = scalar_lea.vmem [#allocation15], 128
    %v1161 = vld [vmem:[%s1160] sm:$0xff]
    %v1162 = vld [vmem:[%s1160 + $0x8] sm:$0xff]
    %v1163 = vld [vmem:[%s1160 + $0x10] sm:$0xff]
    %v1164 = vld [vmem:[%s1160 + $0x18] sm:$0xff]
    %v1165 = vld [vmem:[%s1160 + $0x20] sm:$0xff]
    %v1166 = vld [vmem:[%s1160 + $0x28] sm:$0xff]
    %v1167 = vld [vmem:[%s1160 + $0x30] sm:$0xff]
    %v1168 = vld [vmem:[%s1160 + $0x38] sm:$0xff]
    %v1169 = vld [vmem:[%s1160 + $0x40] sm:$0xff]
    %v1170 = vld [vmem:[%s1160 + $0x48] sm:$0xff]
    %v1171 = vld [vmem:[%s1160 + $0x50] sm:$0xff]
    %v1172 = vld [vmem:[%s1160 + $0x58] sm:$0xff]
    %v1173 = vld [vmem:[%s1160 + $0x60] sm:$0xff]
    %v1174 = vld [vmem:[%s1160 + $0x68] sm:$0xff]
    %v1175 = vld [vmem:[%s1160 + $0x70] sm:$0xff]
    %v1176 = vld [vmem:[%s1160 + $0x78] sm:$0xff]
    %1177 = vmatprep.subr.mxu0 0.0
    %1178 = vmatpush1.msra.mxu0 %v1161
    %1179 = vmatprep.subr.mxu0 0.0
    %1180 = vmatpush1.msra.mxu0 %v1162
    %1181 = vmatprep.subr.mxu0 0.0
    %1182 = vmatpush1.msra.mxu0 %v1163
    %1183 = vmatprep.subr.mxu0 0.0
    %1184 = vmatpush1.msra.mxu0 %v1164
    %1185 = vmatprep.subr.mxu0 0.0
    %1186 = vmatpush1.msra.mxu0 %v1165
    %1187 = vmatprep.subr.mxu0 0.0
    %1188 = vmatpush1.msra.mxu0 %v1166
    %1189 = vmatprep.subr.mxu0 0.0
    %1190 = vmatpush1.msra.mxu0 %v1167
    %1191 = vmatprep.subr.mxu0 0.0
    %1192 = vmatpush1.msra.mxu0 %v1168
    %1193 = vmatprep.subr.mxu0 0.0
    %1194 = vmatpush1.msra.mxu0 %v1169
    %1195 = vmatprep.subr.mxu0 0.0
    %1196 = vmatpush1.msra.mxu0 %v1170
    %1197 = vmatprep.subr.mxu0 0.0
    %1198 = vmatpush1.msra.mxu0 %v1171
    %1199 = vmatprep.subr.mxu0 0.0
    %1200 = vmatpush1.msra.mxu0 %v1172
    %1201 = vmatprep.subr.mxu0 0.0
    %1202 = vmatpush1.msra.mxu0 %v1173
    %1203 = vmatprep.subr.mxu0 0.0
    %1204 = vmatpush1.msra.mxu0 %v1174
    %1205 = vmatprep.subr.mxu0 0.0
    %1206 = vmatpush1.msra.mxu0 %v1175
    %1207 = vmatprep.subr.mxu0 0.0
    %1208 = vmatpush1.msra.mxu0 %v1176
    %1209 = vmatprep.subr.mxu0 0.0
    %1210 = vmatpush1.msra.mxu0 0.0
    %1211 = vmatprep.subr.mxu0 0.0
    %1212 = vmatpush1.msra.mxu0 0.0
    %1213 = vmatprep.subr.mxu0 0.0
    %1214 = vmatpush1.msra.mxu0 0.0
    %1215 = vmatprep.subr.mxu0 0.0
    %1216 = vmatpush1.msra.mxu0 0.0
    %1217 = vmatprep.subr.mxu0 0.0
    %1218 = vmatpush1.msra.mxu0 0.0
    %1219 = vmatprep.subr.mxu0 0.0
    %1220 = vmatpush1.msra.mxu0 0.0
    %1221 = vmatprep.subr.mxu0 0.0
    %1222 = vmatpush1.msra.mxu0 0.0
    %1223 = vmatprep.subr.mxu0 0.0
    %1224 = vmatpush1.msra.mxu0 0.0
    %1225 = vmatprep.subr.mxu0 0.0
    %1226 = vmatpush1.msra.mxu0 0.0
    %1227 = vmatprep.subr.mxu0 0.0
    %1228 = vmatpush1.msra.mxu0 0.0
    %1229 = vmatprep.subr.mxu0 0.0
    %1230 = vmatpush1.msra.mxu0 0.0
    %1231 = vmatprep.subr.mxu0 0.0
    %1232 = vmatpush1.msra.mxu0 0.0
    %1233 = vmatprep.subr.mxu0 0.0
    %1234 = vmatpush1.msra.mxu0 0.0
    %1235 = vmatprep.subr.mxu0 0.0
    %1236 = vmatpush1.msra.mxu0 0.0
    %1237 = vmatprep.subr.mxu0 0.0
    %1238 = vmatpush1.msra.mxu0 0.0
    %1239 = vmatprep.subr.mxu0 0.0
    %1240 = vmatpush1.msra.mxu0 0.0
    %1241 = vmatprep.mubr.f32.mxu0 0.0
    %1242 = vmatmul.mubr.f32.gmra.mrb[0].mxu0 %v1158
    %v1243 = vpop.f32.mrb[0].mxu0
    %v1244 = vadd.f32 0.0, %v1243
    %v1245 = vpop.f32.mrb[0].mxu0
    %1246 = vmatprep.mubr.f32.mxu0 0.0
    %1247 = vmatmul.mubr.f32.gmra.mrb[0].mxu0 %v1159
    %v1248 = vpop.f32.mrb[0].mxu0
    %v1249 = vadd.f32 0.0, %v1248
    %v1250 = vpop.f32.mrb[0].mxu0
    %1251 = vdwg.mxu0
    %s1252 = scalar_lea.vmem [#allocation17], 256
    %v1253 = vld [vmem:[%s1252] sm:$0xff]
    %v1254 = vld [vmem:[%s1252 + $0x8] sm:$0xff]
    %v1255 = vld [vmem:[%s1252 + $0x10] sm:$0xff]
    %v1256 = vld [vmem:[%s1252 + $0x18] sm:$0xff]
    %v1257 = vld [vmem:[%s1252 + $0x20] sm:$0xff]
    %v1258 = vld [vmem:[%s1252 + $0x28] sm:$0xff]
    %v1259 = vld [vmem:[%s1252 + $0x30] sm:$0xff]
    %v1260 = vld [vmem:[%s1252 + $0x38] sm:$0xff]
    %v1261 = vld [vmem:[%s1252 + $0x40] sm:$0xff]
    %v1262 = vld [vmem:[%s1252 + $0x48] sm:$0xff]
    %v1263 = vld [vmem:[%s1252 + $0x50] sm:$0xff]
    %v1264 = vld [vmem:[%s1252 + $0x58] sm:$0xff]
    %v1265 = vld [vmem:[%s1252 + $0x60] sm:$0xff]
    %v1266 = vld [vmem:[%s1252 + $0x68] sm:$0xff]
    %v1267 = vld [vmem:[%s1252 + $0x70] sm:$0xff]
    %v1268 = vld [vmem:[%s1252 + $0x78] sm:$0xff]
    %v1269 = vld [vmem:[%s1252 + $0x80] sm:$0xff]
    %v1270 = vld [vmem:[%s1252 + $0x88] sm:$0xff]
    %v1271 = vld [vmem:[%s1252 + $0x90] sm:$0xff]
    %v1272 = vld [vmem:[%s1252 + $0x98] sm:$0xff]
    %v1273 = vld [vmem:[%s1252 + $0xa0] sm:$0xff]
    %v1274 = vld [vmem:[%s1252 + $0xa8] sm:$0xff]
    %v1275 = vld [vmem:[%s1252 + $0xb0] sm:$0xff]
    %v1276 = vld [vmem:[%s1252 + $0xb8] sm:$0xff]
    %v1277 = vld [vmem:[%s1252 + $0xc0] sm:$0xff]
    %v1278 = vld [vmem:[%s1252 + $0xc8] sm:$0xff]
    %v1279 = vld [vmem:[%s1252 + $0xd0] sm:$0xff]
    %v1280 = vld [vmem:[%s1252 + $0xd8] sm:$0xff]
    %v1281 = vld [vmem:[%s1252 + $0xe0] sm:$0xff]
    %v1282 = vld [vmem:[%s1252 + $0xe8] sm:$0xff]
    %v1283 = vld [vmem:[%s1252 + $0xf0] sm:$0xff]
    %v1284 = vld [vmem:[%s1252 + $0xf8] sm:$0xff]
    %1285 = vmatprep.subr.mxu0 %v1254
    %1286 = vmatpush1.msra.mxu0 %v1253
    %1287 = vmatprep.subr.mxu0 %v1256
    %1288 = vmatpush1.msra.mxu0 %v1255
    %1289 = vmatprep.subr.mxu0 %v1258
    %1290 = vmatpush1.msra.mxu0 %v1257
    %1291 = vmatprep.subr.mxu0 %v1260
    %1292 = vmatpush1.msra.mxu0 %v1259
    %1293 = vmatprep.subr.mxu0 %v1262
    %1294 = vmatpush1.msra.mxu0 %v1261
    %1295 = vmatprep.subr.mxu0 %v1264
    %1296 = vmatpush1.msra.mxu0 %v1263
    %1297 = vmatprep.subr.mxu0 %v1266
    %1298 = vmatpush1.msra.mxu0 %v1265
    %1299 = vmatprep.subr.mxu0 %v1268
    %1300 = vmatpush1.msra.mxu0 %v1267
    %1301 = vmatprep.subr.mxu0 %v1270
    %1302 = vmatpush1.msra.mxu0 %v1269
    %1303 = vmatprep.subr.mxu0 %v1272
    %1304 = vmatpush1.msra.mxu0 %v1271
    %1305 = vmatprep.subr.mxu0 %v1274
    %1306 = vmatpush1.msra.mxu0 %v1273
    %1307 = vmatprep.subr.mxu0 %v1276
    %1308 = vmatpush1.msra.mxu0 %v1275
    %1309 = vmatprep.subr.mxu0 %v1278
    %1310 = vmatpush1.msra.mxu0 %v1277
    %1311 = vmatprep.subr.mxu0 %v1280
    %1312 = vmatpush1.msra.mxu0 %v1279
    %1313 = vmatprep.subr.mxu0 %v1282
    %1314 = vmatpush1.msra.mxu0 %v1281
    %1315 = vmatprep.subr.mxu0 %v1284
    %1316 = vmatpush1.msra.mxu0 %v1283
    %1317 = vmatprep.subr.mxu0 0.0
    %1318 = vmatpush1.msra.mxu0 0.0
    %1319 = vmatprep.subr.mxu0 0.0
    %1320 = vmatpush1.msra.mxu0 0.0
    %1321 = vmatprep.subr.mxu0 0.0
    %1322 = vmatpush1.msra.mxu0 0.0
    %1323 = vmatprep.subr.mxu0 0.0
    %1324 = vmatpush1.msra.mxu0 0.0
    %1325 = vmatprep.subr.mxu0 0.0
    %1326 = vmatpush1.msra.mxu0 0.0
    %1327 = vmatprep.subr.mxu0 0.0
    %1328 = vmatpush1.msra.mxu0 0.0
    %1329 = vmatprep.subr.mxu0 0.0
    %1330 = vmatpush1.msra.mxu0 0.0
    %1331 = vmatprep.subr.mxu0 0.0
    %1332 = vmatpush1.msra.mxu0 0.0
    %1333 = vmatprep.subr.mxu0 0.0
    %1334 = vmatpush1.msra.mxu0 0.0
    %1335 = vmatprep.subr.mxu0 0.0
    %1336 = vmatpush1.msra.mxu0 0.0
    %1337 = vmatprep.subr.mxu0 0.0
    %1338 = vmatpush1.msra.mxu0 0.0
    %1339 = vmatprep.subr.mxu0 0.0
    %1340 = vmatpush1.msra.mxu0 0.0
    %1341 = vmatprep.subr.mxu0 0.0
    %1342 = vmatpush1.msra.mxu0 0.0
    %1343 = vmatprep.subr.mxu0 0.0
    %1344 = vmatpush1.msra.mxu0 0.0
    %1345 = vmatprep.subr.mxu0 0.0
    %1346 = vmatpush1.msra.mxu0 0.0
    %1347 = vmatprep.subr.mxu0 0.0
    %1348 = vmatpush1.msra.mxu0 0.0
    %1349 = vmatprep.mubr.f32.mxu0 0.0
    %1350 = vmatmul.mubr.f32.gmra.mrb[0].mxu0 %v1244
    %v1351 = vpop.f32.mrb[0].mxu0
    %v1352 = vadd.f32 0.0, %v1351
    %v1353 = vpop.f32.mrb[0].mxu0
    %v1354 = vadd.f32 0.0, %v1353
    %1355 = vmatprep.mubr.f32.mxu0 0.0
    %1356 = vmatmul.mubr.f32.gmra.mrb[0].mxu0 %v1249
    %v1357 = vpop.f32.mrb[0].mxu0
    %v1358 = vadd.f32 0.0, %v1357
    %v1359 = vpop.f32.mrb[0].mxu0
    %v1360 = vadd.f32 0.0, %v1359
    %1361 = vdwg.mxu0
    %v1362 = vmul.f32 %v1352, %v267
    %v1363 = vmul.f32 %v1358, %v268
    %v1364 = vadd.f32 %v1362, %v1363
    %v1365 = vrot.slane %v1364, 4
    %v1366 = vadd.f32 %v1364, %v1365
    %v1367 = vrot.slane %v1366, 2
    %v1368 = vadd.f32 %v1366, %v1367
    %v1369 = vrot.slane %v1368, 1
    %v1370 = vadd.f32 %v1368, %v1369
    %v1371 = vadd.f32 %v1354, %v1370
    %v1372 = vadd.f32 %v1360, %v1370
    %v1373 = vmul.f32 %v1371, 0.2
    %v1374 = vmul.f32 %v1372, 0.2
    %v1375 = vmax.f32 %v1371, %v1373
    %v1376 = vmax.f32 %v1372, %v1374
    %v1377 = vadd.f32 %v1375, %v265
    %v1378 = vadd.f32 %v1376, %v266
    %1379 = vmax.xlane.f32.xlu0 %v1377
    %v1380 = vpop.xlane.xlu0 %1379
    %1381 = vmax.xlane.f32.xlu0 %v1378
    %v1382 = vpop.xlane.xlu0 %1381
    %v1383 = vsub.f32 %v1377, %v1380
    %v1384 = vsub.f32 %v1378, %v1382
    %v1385 = vmul.f32 %v1383, 1.442695
    %v1386 = vpow.pop %v1385
    %v1387 = vmul.f32 %v1384, 1.442695
    %v1388 = vpow.pop %v1387
    %1389 = vmatprep.subr.mxu0 0.0
    %1390 = vmatpush1.msra.mxu0 %v270
    %1391 = vmatprep.subr.mxu0 0.0
    %1392 = vmatpush1.msra.mxu0 %v271
    %1393 = vmatprep.subr.mxu0 0.0
    %1394 = vmatpush1.msra.mxu0 %v272
    %1395 = vmatprep.subr.mxu0 0.0
    %1396 = vmatpush1.msra.mxu0 %v273
    %1397 = vmatprep.subr.mxu0 0.0
    %1398 = vmatpush1.msra.mxu0 %v274
    %1399 = vmatprep.subr.mxu0 0.0
    %1400 = vmatpush1.msra.mxu0 %v275
    %1401 = vmatprep.subr.mxu0 0.0
    %1402 = vmatpush1.msra.mxu0 %v276
    %1403 = vmatprep.subr.mxu0 0.0
    %1404 = vmatpush1.msra.mxu0 %v277
    %1405 = vmatprep.subr.mxu0 0.0
    %1406 = vmatpush1.msra.mxu0 %v278
    %1407 = vmatprep.subr.mxu0 0.0
    %1408 = vmatpush1.msra.mxu0 %v279
    %1409 = vmatprep.subr.mxu0 0.0
    %1410 = vmatpush1.msra.mxu0 %v280
    %1411 = vmatprep.subr.mxu0 0.0
    %1412 = vmatpush1.msra.mxu0 %v281
    %1413 = vmatprep.subr.mxu0 0.0
    %1414 = vmatpush1.msra.mxu0 %v282
    %1415 = vmatprep.subr.mxu0 0.0
    %1416 = vmatpush1.msra.mxu0 %v283
    %1417 = vmatprep.subr.mxu0 0.0
    %1418 = vmatpush1.msra.mxu0 %v284
    %1419 = vmatprep.subr.mxu0 0.0
    %1420 = vmatpush1.msra.mxu0 %v285
    %1421 = vmatprep.subr.mxu0 0.0
    %1422 = vmatpush1.msra.mxu0 0.0
    %1423 = vmatprep.subr.mxu0 0.0
    %1424 = vmatpush1.msra.mxu0 0.0
    %1425 = vmatprep.subr.mxu0 0.0
    %1426 = vmatpush1.msra.mxu0 0.0
    %1427 = vmatprep.subr.mxu0 0.0
    %1428 = vmatpush1.msra.mxu0 0.0
    %1429 = vmatprep.subr.mxu0 0.0
    %1430 = vmatpush1.msra.mxu0 0.0
    %1431 = vmatprep.subr.mxu0 0.0
    %1432 = vmatpush1.msra.mxu0 0.0
    %1433 = vmatprep.subr.mxu0 0.0
    %1434 = vmatpush1.msra.mxu0 0.0
    %1435 = vmatprep.subr.mxu0 0.0
    %1436 = vmatpush1.msra.mxu0 0.0
    %1437 = vmatprep.subr.mxu0 0.0
    %1438 = vmatpush1.msra.mxu0 0.0
    %1439 = vmatprep.subr.mxu0 0.0
    %1440 = vmatpush1.msra.mxu0 0.0
    %1441 = vmatprep.subr.mxu0 0.0
    %1442 = vmatpush1.msra.mxu0 0.0
    %1443 = vmatprep.subr.mxu0 0.0
    %1444 = vmatpush1.msra.mxu0 0.0
    %1445 = vmatprep.subr.mxu0 0.0
    %1446 = vmatpush1.msra.mxu0 0.0
    %1447 = vmatprep.subr.mxu0 0.0
    %1448 = vmatpush1.msra.mxu0 0.0
    %1449 = vmatprep.subr.mxu0 0.0
    %1450 = vmatpush1.msra.mxu0 0.0
    %1451 = vmatprep.subr.mxu0 0.0
    %1452 = vmatpush1.msra.mxu0 0.0
    %1453 = vmatprep.mubr.f32.mxu0 0.0
    %1454 = vmatmul.mubr.f32.gmra.mrb[0].mxu0 %v1386
    %v1455 = vpop.f32.mrb[0].mxu0
    %v1456 = vadd.f32 0.0, %v1455
    %v1457 = vpop.f32.mrb[0].mxu0
    %1458 = vmatprep.mubr.f32.mxu0 0.0
    %1459 = vmatmul.mubr.f32.gmra.mrb[0].mxu0 %v1388
    %v1460 = vpop.f32.mrb[0].mxu0
    %v1461 = vadd.f32 0.0, %v1460
    %v1462 = vpop.f32.mrb[0].mxu0
    %1463 = vdwg.mxu0
    %v1464 = vrcp.pop %v1456
    %v1465 = vrcp.pop %v1461
    %v1467 = vsel %vm312, %v1464, 0
    %v1470 = vsel %vm312, %v1465, 0
    %1472 = vmatprep.subr.mxu0 0.0
    %1473 = vmatpush1.msra.mxu0 %v269
    %1474 = vmatprep.subr.mxu0 0.0
    %1475 = vmatpush1.msra.mxu0 0.0
    %1476 = vmatprep.subr.mxu0 0.0
    %1477 = vmatpush1.msra.mxu0 0.0
    %1478 = vmatprep.subr.mxu0 0.0
    %1479 = vmatpush1.msra.mxu0 0.0
    %1480 = vmatprep.subr.mxu0 0.0
    %1481 = vmatpush1.msra.mxu0 0.0
    %1482 = vmatprep.subr.mxu0 0.0
    %1483 = vmatpush1.msra.mxu0 0.0
    %1484 = vmatprep.subr.mxu0 0.0
    %1485 = vmatpush1.msra.mxu0 0.0
    %1486 = vmatprep.subr.mxu0 0.0
    %1487 = vmatpush1.msra.mxu0 0.0
    %1488 = vmatprep.subr.mxu0 0.0
    %1489 = vmatpush1.msra.mxu0 0.0
    %1490 = vmatprep.subr.mxu0 0.0
    %1491 = vmatpush1.msra.mxu0 0.0
    %1492 = vmatprep.subr.mxu0 0.0
    %1493 = vmatpush1.msra.mxu0 0.0
    %1494 = vmatprep.subr.mxu0 0.0
    %1495 = vmatpush1.msra.mxu0 0.0
    %1496 = vmatprep.subr.mxu0 0.0
    %1497 = vmatpush1.msra.mxu0 0.0
    %1498 = vmatprep.subr.mxu0 0.0
    %1499 = vmatpush1.msra.mxu0 0.0
    %1500 = vmatprep.subr.mxu0 0.0
    %1501 = vmatpush1.msra.mxu0 0.0
    %1502 = vmatprep.subr.mxu0 0.0
    %1503 = vmatpush1.msra.mxu0 0.0
    %1504 = vmatprep.subr.mxu0 0.0
    %1505 = vmatpush1.msra.mxu0 0.0
    %1506 = vmatprep.subr.mxu0 0.0
    %1507 = vmatpush1.msra.mxu0 0.0
    %1508 = vmatprep.subr.mxu0 0.0
    %1509 = vmatpush1.msra.mxu0 0.0
    %1510 = vmatprep.subr.mxu0 0.0
    %1511 = vmatpush1.msra.mxu0 0.0
    %1512 = vmatprep.subr.mxu0 0.0
    %1513 = vmatpush1.msra.mxu0 0.0
    %1514 = vmatprep.subr.mxu0 0.0
    %1515 = vmatpush1.msra.mxu0 0.0
    %1516 = vmatprep.subr.mxu0 0.0
    %1517 = vmatpush1.msra.mxu0 0.0
    %1518 = vmatprep.subr.mxu0 0.0
    %1519 = vmatpush1.msra.mxu0 0.0
    %1520 = vmatprep.subr.mxu0 0.0
    %1521 = vmatpush1.msra.mxu0 0.0
    %1522 = vmatprep.subr.mxu0 0.0
    %1523 = vmatpush1.msra.mxu0 0.0
    %1524 = vmatprep.subr.mxu0 0.0
    %1525 = vmatpush1.msra.mxu0 0.0
    %1526 = vmatprep.subr.mxu0 0.0
    %1527 = vmatpush1.msra.mxu0 0.0
    %1528 = vmatprep.subr.mxu0 0.0
    %1529 = vmatpush1.msra.mxu0 0.0
    %1530 = vmatprep.subr.mxu0 0.0
    %1531 = vmatpush1.msra.mxu0 0.0
    %1532 = vmatprep.subr.mxu0 0.0
    %1533 = vmatpush1.msra.mxu0 0.0
    %1534 = vmatprep.subr.mxu0 0.0
    %1535 = vmatpush1.msra.mxu0 0.0
    %1536 = vmatprep.mubr.f32.mxu0 0.0
    %1537 = vmatmul.mubr.f32.gmra.mrb[0].mxu0 %v1467
    %v1538 = vpop.f32.mrb[0].mxu0
    %v1539 = vadd.f32 0.0, %v1538
    %v1540 = vpop.f32.mrb[0].mxu0
    %1541 = vmatprep.mubr.f32.mxu0 0.0
    %1542 = vmatmul.mubr.f32.gmra.mrb[0].mxu0 %v1470
    %v1543 = vpop.f32.mrb[0].mxu0
    %v1544 = vadd.f32 0.0, %v1543
    %v1545 = vpop.f32.mrb[0].mxu0
    %1546 = vdwg.mxu0
    %v1547 = vmul.f32 %v1386, %v1539
    %v1548 = vmul.f32 %v1388, %v1544
    %v1549 = vmul.f32 %v1244, %v286
    %v1550 = vmul.f32 %v1249, %v287
    %v1551 = vmul.f32 %v1244, %v288
    %v1552 = vmul.f32 %v1249, %v289
    %v1553 = vmul.f32 %v1244, %v290
    %v1554 = vmul.f32 %v1249, %v291
    %v1555 = vmul.f32 %v1244, %v292
    %v1556 = vmul.f32 %v1249, %v293
    %v1557 = vmul.f32 %v1244, %v294
    %v1558 = vmul.f32 %v1249, %v295
    %v1559 = vmul.f32 %v1244, %v296
    %v1560 = vmul.f32 %v1249, %v297
    %v1561 = vmul.f32 %v1244, %v298
    %v1562 = vmul.f32 %v1249, %v299
    %v1563 = vmul.f32 %v1244, %v300
    %v1564 = vmul.f32 %v1249, %v301
    %s1565 = scalar_lea.vmem [#allocation18], 1
    %v1566 = vld [vmem:[%s1565] sm:$0x1]
    %v1568 = vlaneseq
    %v1569 = vshrl.u32 %v1568, 7
    %v1570 = vsub.s32 0, %v1569
    %v1571 = vrot.slane %v1566, %v1570
    %1573 = vmatprep.subr.mxu0 0.0
    %1574 = vmatpush1.msra.mxu0 %v1549
    %1575 = vmatprep.subr.mxu0 0.0
    %1576 = vmatpush1.msra.mxu0 %v1550
    %1577 = vmatprep.subr.mxu0 0.0
    %1578 = vmatpush1.msra.mxu0 %v1551
    %1579 = vmatprep.subr.mxu0 0.0
    %1580 = vmatpush1.msra.mxu0 %v1552
    %1581 = vmatprep.subr.mxu0 0.0
    %1582 = vmatpush1.msra.mxu0 %v1553
    %1583 = vmatprep.subr.mxu0 0.0
    %1584 = vmatpush1.msra.mxu0 %v1554
    %1585 = vmatprep.subr.mxu0 0.0
    %1586 = vmatpush1.msra.mxu0 %v1555
    %1587 = vmatprep.subr.mxu0 0.0
    %1588 = vmatpush1.msra.mxu0 %v1556
    %1589 = vmatprep.subr.mxu0 0.0
    %1590 = vmatpush1.msra.mxu0 %v1557
    %1591 = vmatprep.subr.mxu0 0.0
    %1592 = vmatpush1.msra.mxu0 %v1558
    %1593 = vmatprep.subr.mxu0 0.0
    %1594 = vmatpush1.msra.mxu0 %v1559
    %1595 = vmatprep.subr.mxu0 0.0
    %1596 = vmatpush1.msra.mxu0 %v1560
    %1597 = vmatprep.subr.mxu0 0.0
    %1598 = vmatpush1.msra.mxu0 %v1561
    %1599 = vmatprep.subr.mxu0 0.0
    %1600 = vmatpush1.msra.mxu0 %v1562
    %1601 = vmatprep.subr.mxu0 0.0
    %1602 = vmatpush1.msra.mxu0 %v1563
    %1603 = vmatprep.subr.mxu0 0.0
    %1604 = vmatpush1.msra.mxu0 %v1564
    %1605 = vmatprep.subr.mxu0 0.0
    %1606 = vmatpush1.msra.mxu0 0.0
    %1607 = vmatprep.subr.mxu0 0.0
    %1608 = vmatpush1.msra.mxu0 0.0
    %1609 = vmatprep.subr.mxu0 0.0
    %1610 = vmatpush1.msra.mxu0 0.0
    %1611 = vmatprep.subr.mxu0 0.0
    %1612 = vmatpush1.msra.mxu0 0.0
    %1613 = vmatprep.subr.mxu0 0.0
    %1614 = vmatpush1.msra.mxu0 0.0
    %1615 = vmatprep.subr.mxu0 0.0
    %1616 = vmatpush1.msra.mxu0 0.0
    %1617 = vmatprep.subr.mxu0 0.0
    %1618 = vmatpush1.msra.mxu0 0.0
    %1619 = vmatprep.subr.mxu0 0.0
    %1620 = vmatpush1.msra.mxu0 0.0
    %1621 = vmatprep.subr.mxu0 0.0
    %1622 = vmatpush1.msra.mxu0 0.0
    %1623 = vmatprep.subr.mxu0 0.0
    %1624 = vmatpush1.msra.mxu0 0.0
    %1625 = vmatprep.subr.mxu0 0.0
    %1626 = vmatpush1.msra.mxu0 0.0
    %1627 = vmatprep.subr.mxu0 0.0
    %1628 = vmatpush1.msra.mxu0 0.0
    %1629 = vmatprep.subr.mxu0 0.0
    %1630 = vmatpush1.msra.mxu0 0.0
    %1631 = vmatprep.subr.mxu0 0.0
    %1632 = vmatpush1.msra.mxu0 0.0
    %1633 = vmatprep.subr.mxu0 0.0
    %1634 = vmatpush1.msra.mxu0 0.0
    %1635 = vmatprep.subr.mxu0 0.0
    %1636 = vmatpush1.msra.mxu0 0.0
    %1637 = vmatprep.mubr.f32.mxu0 0.0
    %1638 = vmatmul.mubr.f32.gmra.mrb[0].mxu0 %v1547
    %v1639 = vpop.f32.mrb[0].mxu0
    %v1640 = vadd.f32 %v1571, %v1639
    %v1641 = vpop.f32.mrb[0].mxu0
    %1642 = vmatprep.mubr.f32.mxu0 0.0
    %1643 = vmatmul.mubr.f32.gmra.mrb[0].mxu0 %v1548
    %v1644 = vpop.f32.mrb[0].mxu0
    %v1645 = vadd.f32 %v1571, %v1644
    %v1646 = vpop.f32.mrb[0].mxu0
    %1647 = vdwg.mxu0
    %v1648 = vadd.f32 %v1158, %v1640
    %v1649 = vadd.f32 %v1159, %v1645
    %s1650 = scalar_lea.vmem [#allocation20], 2
    %v1651 = vld [vmem:[%s1650] sm:$0x1]
    %v1653 = vlaneseq
    %v1654 = vshrl.u32 %v1653, 7
    %v1655 = vsub.s32 0, %v1654
    %v1656 = vrot.slane %v1651, %v1655
    %v1658 = vmul.f32 %v1648, %v1656
    %v1659 = vmul.f32 %v1649, %v1656
    %s1660 = scalar_lea.vmem [#allocation21], 2
    %v1661 = vld [vmem:[%s1660] sm:$0x1]
    %v1663 = vlaneseq
    %v1664 = vshrl.u32 %v1663, 7
    %v1665 = vsub.s32 0, %v1664
    %v1666 = vrot.slane %v1661, %v1665
    %v1668 = vadd.f32 %v1658, %v1666
    %v1669 = vadd.f32 %v1659, %v1666
    %s1670 = scalar_lea.vmem [#allocation23], 256
    %v1671 = vld [vmem:[%s1670] sm:$0xff]
    %v1672 = vld [vmem:[%s1670 + $0x8] sm:$0xff]
    %v1673 = vld [vmem:[%s1670 + $0x10] sm:$0xff]
    %v1674 = vld [vmem:[%s1670 + $0x18] sm:$0xff]
    %v1675 = vld [vmem:[%s1670 + $0x20] sm:$0xff]
    %v1676 = vld [vmem:[%s1670 + $0x28] sm:$0xff]
    %v1677 = vld [vmem:[%s1670 + $0x30] sm:$0xff]
    %v1678 = vld [vmem:[%s1670 + $0x38] sm:$0xff]
    %v1679 = vld [vmem:[%s1670 + $0x40] sm:$0xff]
    %v1680 = vld [vmem:[%s1670 + $0x48] sm:$0xff]
    %v1681 = vld [vmem:[%s1670 + $0x50] sm:$0xff]
    %v1682 = vld [vmem:[%s1670 + $0x58] sm:$0xff]
    %v1683 = vld [vmem:[%s1670 + $0x60] sm:$0xff]
    %v1684 = vld [vmem:[%s1670 + $0x68] sm:$0xff]
    %v1685 = vld [vmem:[%s1670 + $0x70] sm:$0xff]
    %v1686 = vld [vmem:[%s1670 + $0x78] sm:$0xff]
    %v1687 = vld [vmem:[%s1670 + $0x80] sm:$0xff]
    %v1688 = vld [vmem:[%s1670 + $0x88] sm:$0xff]
    %v1689 = vld [vmem:[%s1670 + $0x90] sm:$0xff]
    %v1690 = vld [vmem:[%s1670 + $0x98] sm:$0xff]
    %v1691 = vld [vmem:[%s1670 + $0xa0] sm:$0xff]
    %v1692 = vld [vmem:[%s1670 + $0xa8] sm:$0xff]
    %v1693 = vld [vmem:[%s1670 + $0xb0] sm:$0xff]
    %v1694 = vld [vmem:[%s1670 + $0xb8] sm:$0xff]
    %v1695 = vld [vmem:[%s1670 + $0xc0] sm:$0xff]
    %v1696 = vld [vmem:[%s1670 + $0xc8] sm:$0xff]
    %v1697 = vld [vmem:[%s1670 + $0xd0] sm:$0xff]
    %v1698 = vld [vmem:[%s1670 + $0xd8] sm:$0xff]
    %v1699 = vld [vmem:[%s1670 + $0xe0] sm:$0xff]
    %v1700 = vld [vmem:[%s1670 + $0xe8] sm:$0xff]
    %v1701 = vld [vmem:[%s1670 + $0xf0] sm:$0xff]
    %v1702 = vld [vmem:[%s1670 + $0xf8] sm:$0xff]
    %s1703 = scalar_lea.vmem [#allocation24], 2
    %v1704 = vld [vmem:[%s1703] sm:$0x3]
    %v1706 = vlaneseq
    %v1707 = vshrl.u32 %v1706, 7
    %v1708 = vsub.s32 0, %v1707
    %v1709 = vrot.slane %v1704, %v1708
    %v1710 = vlaneseq
    %v1711 = vshrl.u32 %v1710, 7
    %v1712 = vsub.s32 1, %v1711
    %v1713 = vrot.slane %v1704, %v1712
    %1716 = vmatprep.subr.mxu0 %v1672
    %1717 = vmatpush1.msra.mxu0 %v1671
    %1718 = vmatprep.subr.mxu0 %v1674
    %1719 = vmatpush1.msra.mxu0 %v1673
    %1720 = vmatprep.subr.mxu0 %v1676
    %1721 = vmatpush1.msra.mxu0 %v1675
    %1722 = vmatprep.subr.mxu0 %v1678
    %1723 = vmatpush1.msra.mxu0 %v1677
    %1724 = vmatprep.subr.mxu0 %v1680
    %1725 = vmatpush1.msra.mxu0 %v1679
    %1726 = vmatprep.subr.mxu0 %v1682
    %1727 = vmatpush1.msra.mxu0 %v1681
    %1728 = vmatprep.subr.mxu0 %v1684
    %1729 = vmatpush1.msra.mxu0 %v1683
    %1730 = vmatprep.subr.mxu0 %v1686
    %1731 = vmatpush1.msra.mxu0 %v1685
    %1732 = vmatprep.subr.mxu0 %v1688
    %1733 = vmatpush1.msra.mxu0 %v1687
    %1734 = vmatprep.subr.mxu0 %v1690
    %1735 = vmatpush1.msra.mxu0 %v1689
    %1736 = vmatprep.subr.mxu0 %v1692
    %1737 = vmatpush1.msra.mxu0 %v1691
    %1738 = vmatprep.subr.mxu0 %v1694
    %1739 = vmatpush1.msra.mxu0 %v1693
    %1740 = vmatprep.subr.mxu0 %v1696
    %1741 = vmatpush1.msra.mxu0 %v1695
    %1742 = vmatprep.subr.mxu0 %v1698
    %1743 = vmatpush1.msra.mxu0 %v1697
    %1744 = vmatprep.subr.mxu0 %v1700
    %1745 = vmatpush1.msra.mxu0 %v1699
    %1746 = vmatprep.subr.mxu0 %v1702
    %1747 = vmatpush1.msra.mxu0 %v1701
    %1748 = vmatprep.subr.mxu0 0.0
    %1749 = vmatpush1.msra.mxu0 0.0
    %1750 = vmatprep.subr.mxu0 0.0
    %1751 = vmatpush1.msra.mxu0 0.0
    %1752 = vmatprep.subr.mxu0 0.0
    %1753 = vmatpush1.msra.mxu0 0.0
    %1754 = vmatprep.subr.mxu0 0.0
    %1755 = vmatpush1.msra.mxu0 0.0
    %1756 = vmatprep.subr.mxu0 0.0
    %1757 = vmatpush1.msra.mxu0 0.0
    %1758 = vmatprep.subr.mxu0 0.0
    %1759 = vmatpush1.msra.mxu0 0.0
    %1760 = vmatprep.subr.mxu0 0.0
    %1761 = vmatpush1.msra.mxu0 0.0
    %1762 = vmatprep.subr.mxu0 0.0
    %1763 = vmatpush1.msra.mxu0 0.0
    %1764 = vmatprep.subr.mxu0 0.0
    %1765 = vmatpush1.msra.mxu0 0.0
    %1766 = vmatprep.subr.mxu0 0.0
    %1767 = vmatpush1.msra.mxu0 0.0
    %1768 = vmatprep.subr.mxu0 0.0
    %1769 = vmatpush1.msra.mxu0 0.0
    %1770 = vmatprep.subr.mxu0 0.0
    %1771 = vmatpush1.msra.mxu0 0.0
    %1772 = vmatprep.subr.mxu0 0.0
    %1773 = vmatpush1.msra.mxu0 0.0
    %1774 = vmatprep.subr.mxu0 0.0
    %1775 = vmatpush1.msra.mxu0 0.0
    %1776 = vmatprep.subr.mxu0 0.0
    %1777 = vmatpush1.msra.mxu0 0.0
    %1778 = vmatprep.subr.mxu0 0.0
    %1779 = vmatpush1.msra.mxu0 0.0
    %1780 = vmatprep.mubr.f32.mxu0 0.0
    %1781 = vmatmul.mubr.f32.gmra.mrb[0].mxu0 %v1668
    %v1782 = vpop.f32.mrb[0].mxu0
    %v1783 = vadd.f32 %v1709, %v1782
    %v1784 = vpop.f32.mrb[0].mxu0
    %v1785 = vadd.f32 %v1713, %v1784
    %1786 = vmatprep.mubr.f32.mxu0 0.0
    %1787 = vmatmul.mubr.f32.gmra.mrb[0].mxu0 %v1669
    %v1788 = vpop.f32.mrb[0].mxu0
    %v1789 = vadd.f32 %v1709, %v1788
    %v1790 = vpop.f32.mrb[0].mxu0
    %v1791 = vadd.f32 %v1713, %v1790
    %1792 = vdwg.mxu0
    %v1793 = vmax.f32 %v1783, 0.0
    %v1794 = vmax.f32 %v1785, 0.0
    %v1795 = vmax.f32 %v1789, 0.0
    %v1796 = vmax.f32 %v1791, 0.0
    %s1797 = scalar_lea.vmem %s16, 256
    %v1798 = vld [vmem:[%s1797] sm:$0xff]
    %v1799 = vld [vmem:[%s1797 + $0x8] sm:$0xff]
    %v1800 = vld [vmem:[%s1797 + $0x10] sm:$0xff]
    %v1801 = vld [vmem:[%s1797 + $0x18] sm:$0xff]
    %v1802 = vld [vmem:[%s1797 + $0x20] sm:$0xff]
    %v1803 = vld [vmem:[%s1797 + $0x28] sm:$0xff]
    %v1804 = vld [vmem:[%s1797 + $0x30] sm:$0xff]
    %v1805 = vld [vmem:[%s1797 + $0x38] sm:$0xff]
    %v1806 = vld [vmem:[%s1797 + $0x40] sm:$0xff]
    %v1807 = vld [vmem:[%s1797 + $0x48] sm:$0xff]
    %v1808 = vld [vmem:[%s1797 + $0x50] sm:$0xff]
    %v1809 = vld [vmem:[%s1797 + $0x58] sm:$0xff]
    %v1810 = vld [vmem:[%s1797 + $0x60] sm:$0xff]
    %v1811 = vld [vmem:[%s1797 + $0x68] sm:$0xff]
    %v1812 = vld [vmem:[%s1797 + $0x70] sm:$0xff]
    %v1813 = vld [vmem:[%s1797 + $0x78] sm:$0xff]
    %v1814 = vld [vmem:[%s1797 + $0x80] sm:$0xff]
    %v1815 = vld [vmem:[%s1797 + $0x88] sm:$0xff]
    %v1816 = vld [vmem:[%s1797 + $0x90] sm:$0xff]
    %v1817 = vld [vmem:[%s1797 + $0x98] sm:$0xff]
    %v1818 = vld [vmem:[%s1797 + $0xa0] sm:$0xff]
    %v1819 = vld [vmem:[%s1797 + $0xa8] sm:$0xff]
    %v1820 = vld [vmem:[%s1797 + $0xb0] sm:$0xff]
    %v1821 = vld [vmem:[%s1797 + $0xb8] sm:$0xff]
    %v1822 = vld [vmem:[%s1797 + $0xc0] sm:$0xff]
    %v1823 = vld [vmem:[%s1797 + $0xc8] sm:$0xff]
    %v1824 = vld [vmem:[%s1797 + $0xd0] sm:$0xff]
    %v1825 = vld [vmem:[%s1797 + $0xd8] sm:$0xff]
    %v1826 = vld [vmem:[%s1797 + $0xe0] sm:$0xff]
    %v1827 = vld [vmem:[%s1797 + $0xe8] sm:$0xff]
    %v1828 = vld [vmem:[%s1797 + $0xf0] sm:$0xff]
    %v1829 = vld [vmem:[%s1797 + $0xf8] sm:$0xff]
    %s1830 = scalar_lea.vmem %s17, 1
    %v1831 = vld [vmem:[%s1830] sm:$0x1]
    %v1833 = vlaneseq
    %v1834 = vshrl.u32 %v1833, 7
    %v1835 = vsub.s32 0, %v1834
    %v1836 = vrot.slane %v1831, %v1835
    %1838 = vmatprep.subr.mxu0 0.0
    %1839 = vmatpush1.msra.mxu0 %v1798
    %1840 = vmatprep.subr.mxu0 0.0
    %1841 = vmatpush1.msra.mxu0 %v1799
    %1842 = vmatprep.subr.mxu0 0.0
    %1843 = vmatpush1.msra.mxu0 %v1800
    %1844 = vmatprep.subr.mxu0 0.0
    %1845 = vmatpush1.msra.mxu0 %v1801
    %1846 = vmatprep.subr.mxu0 0.0
    %1847 = vmatpush1.msra.mxu0 %v1802
    %1848 = vmatprep.subr.mxu0 0.0
    %1849 = vmatpush1.msra.mxu0 %v1803
    %1850 = vmatprep.subr.mxu0 0.0
    %1851 = vmatpush1.msra.mxu0 %v1804
    %1852 = vmatprep.subr.mxu0 0.0
    %1853 = vmatpush1.msra.mxu0 %v1805
    %1854 = vmatprep.subr.mxu0 0.0
    %1855 = vmatpush1.msra.mxu0 %v1806
    %1856 = vmatprep.subr.mxu0 0.0
    %1857 = vmatpush1.msra.mxu0 %v1807
    %1858 = vmatprep.subr.mxu0 0.0
    %1859 = vmatpush1.msra.mxu0 %v1808
    %1860 = vmatprep.subr.mxu0 0.0
    %1861 = vmatpush1.msra.mxu0 %v1809
    %1862 = vmatprep.subr.mxu0 0.0
    %1863 = vmatpush1.msra.mxu0 %v1810
    %1864 = vmatprep.subr.mxu0 0.0
    %1865 = vmatpush1.msra.mxu0 %v1811
    %1866 = vmatprep.subr.mxu0 0.0
    %1867 = vmatpush1.msra.mxu0 %v1812
    %1868 = vmatprep.subr.mxu0 0.0
    %1869 = vmatpush1.msra.mxu0 %v1813
    %1870 = vmatprep.subr.mxu0 0.0
    %1871 = vmatpush1.msra.mxu0 %v1814
    %1872 = vmatprep.subr.mxu0 0.0
    %1873 = vmatpush1.msra.mxu0 %v1815
    %1874 = vmatprep.subr.mxu0 0.0
    %1875 = vmatpush1.msra.mxu0 %v1816
    %1876 = vmatprep.subr.mxu0 0.0
    %1877 = vmatpush1.msra.mxu0 %v1817
    %1878 = vmatprep.subr.mxu0 0.0
    %1879 = vmatpush1.msra.mxu0 %v1818
    %1880 = vmatprep.subr.mxu0 0.0
    %1881 = vmatpush1.msra.mxu0 %v1819
    %1882 = vmatprep.subr.mxu0 0.0
    %1883 = vmatpush1.msra.mxu0 %v1820
    %1884 = vmatprep.subr.mxu0 0.0
    %1885 = vmatpush1.msra.mxu0 %v1821
    %1886 = vmatprep.subr.mxu0 0.0
    %1887 = vmatpush1.msra.mxu0 %v1822
    %1888 = vmatprep.subr.mxu0 0.0
    %1889 = vmatpush1.msra.mxu0 %v1823
    %1890 = vmatprep.subr.mxu0 0.0
    %1891 = vmatpush1.msra.mxu0 %v1824
    %1892 = vmatprep.subr.mxu0 0.0
    %1893 = vmatpush1.msra.mxu0 %v1825
    %1894 = vmatprep.subr.mxu0 0.0
    %1895 = vmatpush1.msra.mxu0 %v1826
    %1896 = vmatprep.subr.mxu0 0.0
    %1897 = vmatpush1.msra.mxu0 %v1827
    %1898 = vmatprep.subr.mxu0 0.0
    %1899 = vmatpush1.msra.mxu0 %v1828
    %1900 = vmatprep.subr.mxu0 0.0
    %1901 = vmatpush1.msra.mxu0 %v1829
    %1902 = vmatprep.mubr.f32.mxu0 %v1794
    %1903 = vmatmul.mubr.f32.gmra.mrb[0].mxu0 %v1793
    %v1904 = vpop.f32.mrb[0].mxu0
    %v1905 = vadd.f32 %v1836, %v1904
    %v1906 = vpop.f32.mrb[0].mxu0
    %1907 = vmatprep.mubr.f32.mxu0 %v1796
    %1908 = vmatmul.mubr.f32.gmra.mrb[0].mxu0 %v1795
    %v1909 = vpop.f32.mrb[0].mxu0
    %v1910 = vadd.f32 %v1836, %v1909
    %v1911 = vpop.f32.mrb[0].mxu0
    %1912 = vdwg.mxu0
    %v1913 = vadd.f32 %v1668, %v1905
    %v1914 = vadd.f32 %v1669, %v1910
    %s1915 = scalar_lea.vmem [#allocation20], 3
    %v1916 = vld [vmem:[%s1915] sm:$0x1]
    %v1918 = vlaneseq
    %v1919 = vshrl.u32 %v1918, 7
    %v1920 = vsub.s32 0, %v1919
    %v1921 = vrot.slane %v1916, %v1920
    %v1923 = vmul.f32 %v1913, %v1921
    %v1924 = vmul.f32 %v1914, %v1921
    %s1925 = scalar_lea.vmem [#allocation21], 3
    %v1926 = vld [vmem:[%s1925] sm:$0x1]
    %v1928 = vlaneseq
    %v1929 = vshrl.u32 %v1928, 7
    %v1930 = vsub.s32 0, %v1929
    %v1931 = vrot.slane %v1926, %v1930
    %v1933 = vadd.f32 %v1923, %v1931
    %v1934 = vadd.f32 %v1924, %v1931
    %v1935 = vadd.f32 %v1933, %v1934
    %v1936 = vrot.slane %v1935, 4
    %v1937 = vadd.f32 %v1935, %v1936
    %v1938 = vrot.slane %v1937, 2
    %v1939 = vadd.f32 %v1937, %v1938
    %v1940 = vrot.slane %v1939, 1
    %v1941 = vadd.f32 %v1939, %v1940
    %v1942 = vmul.f32 %v1941, 0.0625
    %v1943 = vld [vmem:[%s18] sm:$0xff]
    %v1944 = vld [vmem:[%s18 + $0x8] sm:$0xff]
    %v1945 = vld [vmem:[%s18 + $0x10] sm:$0xff]
    %v1946 = vld [vmem:[%s18 + $0x18] sm:$0xff]
    %v1947 = vld [vmem:[%s18 + $0x20] sm:$0xff]
    %v1948 = vld [vmem:[%s18 + $0x28] sm:$0xff]
    %v1949 = vld [vmem:[%s18 + $0x30] sm:$0xff]
    %v1950 = vld [vmem:[%s18 + $0x38] sm:$0xff]
    %v1951 = vld [vmem:[%s18 + $0x40] sm:$0xff]
    %v1952 = vld [vmem:[%s18 + $0x48] sm:$0xff]
    %v1953 = vld [vmem:[%s18 + $0x50] sm:$0xff]
    %v1954 = vld [vmem:[%s18 + $0x58] sm:$0xff]
    %v1955 = vld [vmem:[%s18 + $0x60] sm:$0xff]
    %v1956 = vld [vmem:[%s18 + $0x68] sm:$0xff]
    %v1957 = vld [vmem:[%s18 + $0x70] sm:$0xff]
    %v1958 = vld [vmem:[%s18 + $0x78] sm:$0xff]
    %v1959 = vld [vmem:[#allocation6] sm:$0x1]
    %v1960 = vld [vmem:[%s19] sm:$0xff]
    %v1962 = vsel %vm312, %v1959, 0
    %1964 = vmatprep.subr.mxu0 0.0
    %1965 = vmatpush1.msra.mxu0 %v1960
    %1966 = vmatprep.subr.mxu0 0.0
    %1967 = vmatpush1.msra.mxu0 0.0
    %1968 = vmatprep.subr.mxu0 0.0
    %1969 = vmatpush1.msra.mxu0 0.0
    %1970 = vmatprep.subr.mxu0 0.0
    %1971 = vmatpush1.msra.mxu0 0.0
    %1972 = vmatprep.subr.mxu0 0.0
    %1973 = vmatpush1.msra.mxu0 0.0
    %1974 = vmatprep.subr.mxu0 0.0
    %1975 = vmatpush1.msra.mxu0 0.0
    %1976 = vmatprep.subr.mxu0 0.0
    %1977 = vmatpush1.msra.mxu0 0.0
    %1978 = vmatprep.subr.mxu0 0.0
    %1979 = vmatpush1.msra.mxu0 0.0
    %1980 = vmatprep.subr.mxu0 0.0
    %1981 = vmatpush1.msra.mxu0 0.0
    %1982 = vmatprep.subr.mxu0 0.0
    %1983 = vmatpush1.msra.mxu0 0.0
    %1984 = vmatprep.subr.mxu0 0.0
    %1985 = vmatpush1.msra.mxu0 0.0
    %1986 = vmatprep.subr.mxu0 0.0
    %1987 = vmatpush1.msra.mxu0 0.0
    %1988 = vmatprep.subr.mxu0 0.0
    %1989 = vmatpush1.msra.mxu0 0.0
    %1990 = vmatprep.subr.mxu0 0.0
    %1991 = vmatpush1.msra.mxu0 0.0
    %1992 = vmatprep.subr.mxu0 0.0
    %1993 = vmatpush1.msra.mxu0 0.0
    %1994 = vmatprep.subr.mxu0 0.0
    %1995 = vmatpush1.msra.mxu0 0.0
    %1996 = vmatprep.subr.mxu0 0.0
    %1997 = vmatpush1.msra.mxu0 0.0
    %1998 = vmatprep.subr.mxu0 0.0
    %1999 = vmatpush1.msra.mxu0 0.0
    %2000 = vmatprep.subr.mxu0 0.0
    %2001 = vmatpush1.msra.mxu0 0.0
    %2002 = vmatprep.subr.mxu0 0.0
    %2003 = vmatpush1.msra.mxu0 0.0
    %2004 = vmatprep.subr.mxu0 0.0
    %2005 = vmatpush1.msra.mxu0 0.0
    %2006 = vmatprep.subr.mxu0 0.0
    %2007 = vmatpush1.msra.mxu0 0.0
    %2008 = vmatprep.subr.mxu0 0.0
    %2009 = vmatpush1.msra.mxu0 0.0
    %2010 = vmatprep.subr.mxu0 0.0
    %2011 = vmatpush1.msra.mxu0 0.0
    %2012 = vmatprep.subr.mxu0 0.0
    %2013 = vmatpush1.msra.mxu0 0.0
    %2014 = vmatprep.subr.mxu0 0.0
    %2015 = vmatpush1.msra.mxu0 0.0
    %2016 = vmatprep.subr.mxu0 0.0
    %2017 = vmatpush1.msra.mxu0 0.0
    %2018 = vmatprep.subr.mxu0 0.0
    %2019 = vmatpush1.msra.mxu0 0.0
    %2020 = vmatprep.subr.mxu0 0.0
    %2021 = vmatpush1.msra.mxu0 0.0
    %2022 = vmatprep.subr.mxu0 0.0
    %2023 = vmatpush1.msra.mxu0 0.0
    %2024 = vmatprep.subr.mxu0 0.0
    %2025 = vmatpush1.msra.mxu0 0.0
    %2026 = vmatprep.subr.mxu0 0.0
    %2027 = vmatpush1.msra.mxu0 0.0
    %2028 = vmatprep.mubr.f32.mxu0 0.0
    %2029 = vmatmul.mubr.f32.gmra.mrb[0].mxu0 %v1962
    %v2030 = vpop.f32.mrb[0].mxu0
    %v2031 = vadd.f32 0.0, %v2030
    %v2032 = vpop.f32.mrb[0].mxu0
    %2033 = vdwg.mxu0
    %2034 = vmatprep.subr.mxu0 0.0
    %2035 = vmatpush1.msra.mxu0 %v1943
    %2036 = vmatprep.subr.mxu0 0.0
    %2037 = vmatpush1.msra.mxu0 %v1944
    %2038 = vmatprep.subr.mxu0 0.0
    %2039 = vmatpush1.msra.mxu0 %v1945
    %2040 = vmatprep.subr.mxu0 0.0
    %2041 = vmatpush1.msra.mxu0 %v1946
    %2042 = vmatprep.subr.mxu0 0.0
    %2043 = vmatpush1.msra.mxu0 %v1947
    %2044 = vmatprep.subr.mxu0 0.0
    %2045 = vmatpush1.msra.mxu0 %v1948
    %2046 = vmatprep.subr.mxu0 0.0
    %2047 = vmatpush1.msra.mxu0 %v1949
    %2048 = vmatprep.subr.mxu0 0.0
    %2049 = vmatpush1.msra.mxu0 %v1950
    %2050 = vmatprep.subr.mxu0 0.0
    %2051 = vmatpush1.msra.mxu0 %v1951
    %2052 = vmatprep.subr.mxu0 0.0
    %2053 = vmatpush1.msra.mxu0 %v1952
    %2054 = vmatprep.subr.mxu0 0.0
    %2055 = vmatpush1.msra.mxu0 %v1953
    %2056 = vmatprep.subr.mxu0 0.0
    %2057 = vmatpush1.msra.mxu0 %v1954
    %2058 = vmatprep.subr.mxu0 0.0
    %2059 = vmatpush1.msra.mxu0 %v1955
    %2060 = vmatprep.subr.mxu0 0.0
    %2061 = vmatpush1.msra.mxu0 %v1956
    %2062 = vmatprep.subr.mxu0 0.0
    %2063 = vmatpush1.msra.mxu0 %v1957
    %2064 = vmatprep.subr.mxu0 0.0
    %2065 = vmatpush1.msra.mxu0 %v1958
    %2066 = vmatprep.subr.mxu0 0.0
    %2067 = vmatpush1.msra.mxu0 0.0
    %2068 = vmatprep.subr.mxu0 0.0
    %2069 = vmatpush1.msra.mxu0 0.0
    %2070 = vmatprep.subr.mxu0 0.0
    %2071 = vmatpush1.msra.mxu0 0.0
    %2072 = vmatprep.subr.mxu0 0.0
    %2073 = vmatpush1.msra.mxu0 0.0
    %2074 = vmatprep.subr.mxu0 0.0
    %2075 = vmatpush1.msra.mxu0 0.0
    %2076 = vmatprep.subr.mxu0 0.0
    %2077 = vmatpush1.msra.mxu0 0.0
    %2078 = vmatprep.subr.mxu0 0.0
    %2079 = vmatpush1.msra.mxu0 0.0
    %2080 = vmatprep.subr.mxu0 0.0
    %2081 = vmatpush1.msra.mxu0 0.0
    %2082 = vmatprep.subr.mxu0 0.0
    %2083 = vmatpush1.msra.mxu0 0.0
    %2084 = vmatprep.subr.mxu0 0.0
    %2085 = vmatpush1.msra.mxu0 0.0
    %2086 = vmatprep.subr.mxu0 0.0
    %2087 = vmatpush1.msra.mxu0 0.0
    %2088 = vmatprep.subr.mxu0 0.0
    %2089 = vmatpush1.msra.mxu0 0.0
    %2090 = vmatprep.subr.mxu0 0.0
    %2091 = vmatpush1.msra.mxu0 0.0
    %2092 = vmatprep.subr.mxu0 0.0
    %2093 = vmatpush1.msra.mxu0 0.0
    %2094 = vmatprep.subr.mxu0 0.0
    %2095 = vmatpush1.msra.mxu0 0.0
    %2096 = vmatprep.subr.mxu0 0.0
    %2097 = vmatpush1.msra.mxu0 0.0
    %2098 = vmatprep.mubr.f32.mxu0 0.0
    %2099 = vmatmul.mubr.f32.gmra.mrb[0].mxu0 %v1942
    %v2100 = vpop.f32.mrb[0].mxu0
    %v2101 = vadd.f32 %v2031, %v2100
    %v2102 = vpop.f32.mrb[0].mxu0
    %2103 = vdwg.mxu0
    %v2104 = vld [vmem:[%s20] sm:$0x1]
    %v2105 = vadd.f32 %v2101, %v2104
    %v2106 = vmax.f32 %v2105, 0.0
    %v2107 = vld [vmem:[%s21] sm:$0xff]
    %v2108 = vld [vmem:[%s21 + $0x8] sm:$0xff]
    %v2109 = vld [vmem:[%s21 + $0x10] sm:$0xff]
    %v2110 = vld [vmem:[%s21 + $0x18] sm:$0xff]
    %v2111 = vld [vmem:[%s21 + $0x20] sm:$0xff]
    %v2112 = vld [vmem:[%s21 + $0x28] sm:$0xff]
    %v2113 = vld [vmem:[%s21 + $0x30] sm:$0xff]
    %v2114 = vld [vmem:[%s21 + $0x38] sm:$0xff]
    %v2115 = vld [vmem:[%s22] sm:$0x1]
    %vm2116 = vcmask 523264
    %v2118 = vsel %vm2116, %v2106, 0
    %2120 = vmatprep.subr.mxu0 0.0
    %2121 = vmatpush1.msra.mxu0 %v2107
    %2122 = vmatprep.subr.mxu0 0.0
    %2123 = vmatpush1.msra.mxu0 %v2108
    %2124 = vmatprep.subr.mxu0 0.0
    %2125 = vmatpush1.msra.mxu0 %v2109
    %2126 = vmatprep.subr.mxu0 0.0
    %2127 = vmatpush1.msra.mxu0 %v2110
    %2128 = vmatprep.subr.mxu0 0.0
    %2129 = vmatpush1.msra.mxu0 %v2111
    %2130 = vmatprep.subr.mxu0 0.0
    %2131 = vmatpush1.msra.mxu0 %v2112
    %2132 = vmatprep.subr.mxu0 0.0
    %2133 = vmatpush1.msra.mxu0 %v2113
    %2134 = vmatprep.subr.mxu0 0.0
    %2135 = vmatpush1.msra.mxu0 %v2114
    %2136 = vmatprep.subr.mxu0 0.0
    %2137 = vmatpush1.msra.mxu0 0.0
    %2138 = vmatprep.subr.mxu0 0.0
    %2139 = vmatpush1.msra.mxu0 0.0
    %2140 = vmatprep.subr.mxu0 0.0
    %2141 = vmatpush1.msra.mxu0 0.0
    %2142 = vmatprep.subr.mxu0 0.0
    %2143 = vmatpush1.msra.mxu0 0.0
    %2144 = vmatprep.subr.mxu0 0.0
    %2145 = vmatpush1.msra.mxu0 0.0
    %2146 = vmatprep.subr.mxu0 0.0
    %2147 = vmatpush1.msra.mxu0 0.0
    %2148 = vmatprep.subr.mxu0 0.0
    %2149 = vmatpush1.msra.mxu0 0.0
    %2150 = vmatprep.subr.mxu0 0.0
    %2151 = vmatpush1.msra.mxu0 0.0
    %2152 = vmatprep.subr.mxu0 0.0
    %2153 = vmatpush1.msra.mxu0 0.0
    %2154 = vmatprep.subr.mxu0 0.0
    %2155 = vmatpush1.msra.mxu0 0.0
    %2156 = vmatprep.subr.mxu0 0.0
    %2157 = vmatpush1.msra.mxu0 0.0
    %2158 = vmatprep.subr.mxu0 0.0
    %2159 = vmatpush1.msra.mxu0 0.0
    %2160 = vmatprep.subr.mxu0 0.0
    %2161 = vmatpush1.msra.mxu0 0.0
    %2162 = vmatprep.subr.mxu0 0.0
    %2163 = vmatpush1.msra.mxu0 0.0
    %2164 = vmatprep.subr.mxu0 0.0
    %2165 = vmatpush1.msra.mxu0 0.0
    %2166 = vmatprep.subr.mxu0 0.0
    %2167 = vmatpush1.msra.mxu0 0.0
    %2168 = vmatprep.subr.mxu0 0.0
    %2169 = vmatpush1.msra.mxu0 0.0
    %2170 = vmatprep.subr.mxu0 0.0
    %2171 = vmatpush1.msra.mxu0 0.0
    %2172 = vmatprep.subr.mxu0 0.0
    %2173 = vmatpush1.msra.mxu0 0.0
    %2174 = vmatprep.subr.mxu0 0.0
    %2175 = vmatpush1.msra.mxu0 0.0
    %2176 = vmatprep.subr.mxu0 0.0
    %2177 = vmatpush1.msra.mxu0 0.0
    %2178 = vmatprep.subr.mxu0 0.0
    %2179 = vmatpush1.msra.mxu0 0.0
    %2180 = vmatprep.subr.mxu0 0.0
    %2181 = vmatpush1.msra.mxu0 0.0
    %2182 = vmatprep.subr.mxu0 0.0
    %2183 = vmatpush1.msra.mxu0 0.0
    %2184 = vmatprep.mubr.f32.mxu0 0.0
    %2185 = vmatmul.mubr.f32.gmra.mrb[0].mxu0 %v2118
    %v2186 = vpop.f32.mrb[0].mxu0
    %v2187 = vadd.f32 %v2115, %v2186
    %v2188 = vpop.f32.mrb[0].mxu0
    %2189 = vdwg.mxu0
    %v2190 = vmax.f32 %v2187, 0.0
    %v2191 = vld [vmem:[%s23] sm:$0x1]
    %v2192 = vmul.f32 %v2190, %v2191
    %vm2193 = vcmask 253952
    %v2194 = vsel %vm2193, %v2192, 0.0
    %2195 = vadd.xlane.f32.xlu0 %v2194
    %v2196 = vpop.xlane.xlu0 %2195
    %v2197 = vld [vmem:[#allocation2] sm:$0x1]
    %v2198 = vadd.f32 %v2196, %v2197
    %vm2199 = vcmask 0
    %2200 = vst.msk [vmem:[#allocation26] sm:$0x1] %vm2199, %v2198
    // Predicated region
    $region158: #{tpu_custom_call.1} parent=1 // pred_check
      _
    $region159: #{tpu_custom_call.1} parent=1 // pred_check_branch
      %2202 = sbr.rel (0) target = $region161
    $region160: #{tpu_custom_call.1} parent=1 // pred_region
      %s2204 = ssub.s32 16, 16
      %2205 = vsyncadd [#allocation5], %s2204
      %s2207 = sshll.u32 [#allocation26], 4
      %s2208 = int_to_ptr.vmem [resolvable:$true] %s2207
      %2210 = dma.vmem_to_hbm [thread:$0]  %s2208, 16, %s25, [#allocation5]
    $region161: #{tpu_custom_call.1} parent=1 // pred_fallthru
      _
    // Predicated region
    $region162: #{tpu_custom_call.1} parent=1 // pred_check
      _
    $region163: #{tpu_custom_call.1} parent=1 // pred_check_branch
      %2212 = sbr.rel (0) target = $region165
    $region164: #{tpu_custom_call.1} parent=1 // pred_region
      %2213 = dma.done [#allocation5], 16
    $region165: #{tpu_custom_call.1} parent=1 // pred_fallthru
      _
    %2214 = vsyncpa [#allocation4], 1
    %2215 = vsyncpa [#allocation7], 1
    %2216 = vsyncpa [#allocation10], 1
    %2217 = vsyncpa [#allocation13], 1
    %2218 = vsyncpa [#allocation16], 1
    %2219 = vsyncpa [#allocation19], 1
    %2220 = vsyncpa [#allocation22], 1
    %2221 = vsyncpa [#allocation25], 1
    %2222 = vsyncpa [#allocation5], 1

</llo_original>
